<compile_context>
chip_gen: v7x
topology: tpu7x:2x2x1
jax: 0.10.0
libtpu: 0.0.40
codegen_flags: <defaults>
</compile_context>

<pallas_src>
import math
import functools

import numpy as np
import jax
import jax.numpy as jnp
from jax import lax
from jax.experimental import pallas as pl
from jax.experimental.pallas import tpu as pltpu  # noqa: F401  (TPU backend)

# ----------------------------- model hyper-parameters -----------------------------
D_MODEL = 32
NUM_HEADS = 4
D_HEAD = D_MODEL // NUM_HEADS
DROPOUT_P = 0.1  # nn.Dropout is identity at inference
BATCH = 2
SEQ = 8
MAX_LEN = 16
NEG_INF = -1e9


# ----------------------------- fused attention kernel -----------------------------
def _mhsa_kernel(x_ref, w_ref, mb_ref, out_ref, *attn_refs, B, T, H, dh):
    f32 = jnp.float32
    D = H * dh
    BT = B * T
    HT = H * BT
    W = BT                         # batch-flattened key axis (score width)
    lg_bt = BT.bit_length() - 1    # power-of-two sizes asserted in the wrapper
    lg_dh = dh.bit_length() - 1
    zero = f32(0.0)

    # ---- fused Q/K/V/pos projections: ONE (BT,4D)@(4D,4D) MXU op -----------------
    proj = jnp.dot(x_ref[...], w_ref[0:4 * D, :], preferred_element_type=f32)  # (BT,4D)
    Q = proj[:, 0 * D:1 * D]       # pre-scaled by 1/sqrt(D) (folded into wq / bqu / bqv)
    K = proj[:, 1 * D:2 * D]
    V = proj[:, 2 * D:3 * D]
    Eb = proj[:, 3 * D:4 * D]      # pos-enc projection; rows exactly T-periodic in batch

    wo = w_ref[4 * D:5 * D, 0:D]                      # (D, D)
    bias_blk = w_ref[5 * D:5 * D + 8, 0:D]            # aligned (8, D) load
    bqu = bias_blk[0:1, :]                            # (bq + u_bias) / sqrt(D)
    bqv = bias_blk[1:2, :]                            # (bq + v_bias) / sqrt(D)
    bo = bias_blk[2:3, :]

    # ---- head-stacked (sublane) queries / values ---------------------------------
    # hm[h*BT + i, d] is True on head-h feature columns.
    hm = (lax.broadcasted_iota(jnp.int32, (HT, D), 0) >> lg_bt) == \
         (lax.broadcasted_iota(jnp.int32, (HT, D), 1) >> lg_dh)
    Qs = jnp.concatenate([Q] * H, axis=0)                                  # (HT, D)
    Vs = jnp.concatenate([V] * H, axis=0)                                  # (HT, D)
    Qu_s = jnp.where(hm, Qs + bqu, zero)
    Qv_s = jnp.where(hm, Qs + bqv, zero)
    V_s = jnp.where(hm, Vs, zero)

    # ---- all-head content / positional scores: TWO MXU ops -----------------------
    dnums = (((1,), (1,)), ((), ()))
    content = lax.dot_general(Qu_s, K, dnums, preferred_element_type=f32)   # (HT, W)
    praw = lax.dot_general(Qv_s, Eb, dnums, preferred_element_type=f32)     # (HT, W)

    # ---- exact Transformer-XL relative shift (pure data movement) ----------------
    # praw columns are exactly T-periodic, so a lane rotation by s acts as s mod T.
    def roll_right(a, s):
        # static right rotation along the key axis (concat-of-slices: robust lowering)
        s = s % W
        if s == 0:
            return a
        return jnp.concatenate([a[:, W - s:], a[:, :W - s]], axis=1)

    p_up = jnp.concatenate([praw[1:, :], praw[:1, :]], axis=0)      # row t <- t + 1
    # shared variable roll by (t+1) mod T: lower part uses praw, upper part uses the
    # statically pre-rolled row-shifted copy (total rotation (t+2) mod T).
    pcat = jnp.concatenate([praw, roll_right(p_up, 1)], axis=0)     # (2*HT, W)
    amt = ((lax.broadcasted_iota(jnp.int32, (2 * HT, W), 0) & (T - 1)) + 1) & (T - 1)
    for kbit in range(max(1, (T - 1).bit_length())):
        take = ((amt >> kbit) & 1) == 1
        pcat = jnp.where(take, roll_right(pcat, 1 << kbit), pcat)
    lower = pcat[:HT, :]
    upper = pcat[HT:, :]

    t_row = lax.broadcasted_iota(jnp.int32, (HT, W), 0) & (T - 1)
    col_t = lax.broadcasted_iota(jnp.int32, (HT, W), 1) & (T - 1)
    pos = jnp.where(col_t <= t_row, lower,
                    jnp.where(col_t == t_row + 1, zero, upper))     # (HT, W)

    # ---- batched masked softmax over all heads (single pass on (HT, W)) ----------
    score = content + pos + mb_ref[...]
    m = jnp.max(score, axis=1, keepdims=True)
    e = jnp.exp(score - m)
    s = jnp.sum(e, axis=1, keepdims=True)
    attn = e * pl.reciprocal(s, approx=False)                       # (HT, W)
    if attn_refs:
        attn_refs[0][...] = attn                                    # one slab store

    # ---- context + output projection: TWO MXU ops --------------------------------
    attn_wide = jnp.concatenate(
        [attn[h * BT:(h + 1) * BT, :] for h in range(H)], axis=1)   # (BT, HT)
    ctx = jnp.dot(attn_wide, V_s, preferred_element_type=f32)       # (BT, D) lane-dense
    out_ref[...] = jnp.dot(ctx, wo, preferred_element_type=f32) + bo


# ----------------------------- wrapper ---------------------------------------------
def conformer_mhsa_pallas(query, key, value, mask, encoding, params, *, with_attn=True):
    """query/key/value: (B, T, D) f32; mask: (B, 1, T) bool (True == masked);
    encoding: (1, max_len, D) f32.  Returns (outputs (B, T, D), attn (B, H, T, T))."""
    f32 = jnp.float32
    B, T, D = query.shape
    H, dh = NUM_HEADS, D_HEAD
    BT, HT = B * T, NUM_HEADS * B * T
    assert D == D_MODEL and T >= 2
    # power-of-two sizes let the kernel use shifts/ands instead of vector div/mod
    assert T & (T - 1) == 0 and dh & (dh - 1) == 0 and BT & (BT - 1) == 0
    scale = 1.0 / math.sqrt(D)

    # ---- pack the four projection inputs along lanes: (BT, 4D) --------------------
    enc_b = jnp.tile(encoding[0, :T, :], (B, 1))                     # (BT, D)
    x = jnp.concatenate([query.reshape(BT, D), key.reshape(BT, D),
                         value.reshape(BT, D), enc_b], axis=1)       # (BT, 4D)

    # ---- pack all weights / biases into one operand -------------------------------
    z = jnp.zeros((D, D), f32)
    wq_s = params["wq"] * scale                  # fold the 1/sqrt(D) score scale
    w_blk = jnp.concatenate([
        jnp.concatenate([wq_s, z, z, z], axis=1),
        jnp.concatenate([z, params["wk"], z, z], axis=1),
        jnp.concatenate([z, z, params["wv"], z], axis=1),
        jnp.concatenate([z, z, z, params["wp"]], axis=1)], axis=0)   # (4D, 4D)
    wo_rows = jnp.concatenate([params["wo"], jnp.zeros((D, 3 * D), f32)], axis=1)
    bqu = ((params["bq"] + params["u_bias"].reshape(D)) * scale).reshape(1, D)
    bqv = ((params["bq"] + params["v_bias"].reshape(D)) * scale).reshape(1, D)
    bo = params["bo"].reshape(1, D)
    b_rows = jnp.concatenate([jnp.concatenate([bqu, bqv, bo], axis=0),
                              jnp.zeros((3, 3 * D), f32)], axis=1)   # (3, 4D)
    pad = jnp.zeros((5, 4 * D), f32)                                 # sublane padding
    w_packed = jnp.concatenate([w_blk, wo_rows, b_rows, pad], axis=0)  # (5D+8, 4D)

    # ---- additive attention-mask bias (padding + cross-batch), pre-tiled over heads
    batch_ids = jnp.arange(BT, dtype=jnp.int32) // T
    colcode = jnp.where(mask.reshape(BT), jnp.int32(-1), batch_ids)
    mb2 = jnp.where(batch_ids[:, None] == colcode[None, :], 0.0, NEG_INF).astype(f32)
    mb = jnp.tile(mb2, (H, 1))                                       # (HT, BT)

    kernel = functools.partial(_mhsa_kernel, B=B, T=T, H=H, dh=dh)
    out_shapes = (jax.ShapeDtypeStruct((BT, D), f32),)
    if with_attn:
        out_shapes = out_shapes + (jax.ShapeDtypeStruct((HT, BT), f32),)
    res = pl.pallas_call(kernel, out_shape=out_shapes)(x, w_packed, mb)

    out = res[0].reshape(B, T, D)
    # TODO(synk): nn.Dropout(p=0.1) on the output is identity in eval/inference mode;
    # train-mode RNG dropout is not implemented.
    if not with_attn:
        return out, None
    # extract the per-(b, h) diagonal (T, T) blocks of the lane-dense slab here
    # (free XLA slicing) instead of B*H tiny masked stores inside the kernel.
    attn5 = res[1].reshape(H, B, T, B, T)
    attn = jnp.stack([attn5[:, b, :, b, :] for b in range(B)], axis=0)  # (B, H, T, T)
    return out, attn


# ----------------------------- pure-JAX reference (torch semantics) ----------------
def conformer_mhsa_reference(query, key, value, mask, encoding, params):
    B, T, D = query.shape
    H, dh = NUM_HEADS, D_HEAD
    enc = jnp.broadcast_to(encoding[:, :T, :], (B, T, D))
    q = query @ params["wq"] + params["bq"]
    k = key @ params["wk"]
    v = value @ params["wv"]
    pe = enc @ params["wp"]
    q = q.reshape(B, T, H, dh)
    k = k.reshape(B, T, H, dh).transpose(0, 2, 1, 3)
    v = v.reshape(B, T, H, dh).transpose(0, 2, 1, 3)
    pe = pe.reshape(B, T, H, dh)
    content = jnp.einsum("bihd,bhjd->bhij", q + params["u_bias"], k)
    pos = jnp.einsum("bihd,bjhd->bhij", q + params["v_bias"], pe)
    # relative shift (pad / reshape / drop / reshape, exactly as torch)
    zeros = jnp.zeros((B, H, T, 1), jnp.float32)
    padded = jnp.concatenate([zeros, pos], axis=-1).reshape(B, H, T + 1, T)
    pos = padded[:, :, 1:].reshape(B, H, T, T)
    score = (content + pos) / math.sqrt(D)
    score = jnp.where(mask[:, None, :, :], -1e9, score)
    attn = jax.nn.softmax(score, axis=-1)
    ctx = jnp.einsum("bhij,bhjd->bihd", attn, v).reshape(B, T, D)
    out = ctx @ params["wo"] + params["bo"]
    return out, attn


# ----------------------------- deterministic parameters / inputs -------------------
def _make_params(key):
    ks = jax.random.split(key, 9)
    s = 1.0 / math.sqrt(D_MODEL)
    # weights stored as (in, out) == torch_weight.T ; biases as (out,)
    return {
        "wq": jax.random.normal(ks[0], (D_MODEL, D_MODEL), jnp.float32) * s,
        "bq": jax.random.normal(ks[1], (D_MODEL,), jnp.float32) * 0.1,
        "wk": jax.random.normal(ks[2], (D_MODEL, D_MODEL), jnp.float32) * s,
        "wv": jax.random.normal(ks[3], (D_MODEL, D_MODEL), jnp.float32) * s,
        "wp": jax.random.normal(ks[4], (D_MODEL, D_MODEL), jnp.float32) * s,
        "u_bias": jax.random.normal(ks[5], (NUM_HEADS, D_HEAD), jnp.float32) * 0.1,
        "v_bias": jax.random.normal(ks[6], (NUM_HEADS, D_HEAD), jnp.float32) * 0.1,
        "wo": jax.random.normal(ks[7], (D_MODEL, D_MODEL), jnp.float32) * s,
        "bo": jax.random.normal(ks[8], (D_MODEL,), jnp.float32) * 0.1,
    }


def _sinusoidal_encoding(max_len, d_model):
    pos = jnp.arange(max_len, dtype=jnp.float32)[:, None]
    i = jnp.arange(d_model, dtype=jnp.float32)[None, :]
    angle = pos / jnp.power(10000.0, 2.0 * jnp.floor(i / 2.0) / d_model)
    enc = jnp.where((jnp.arange(d_model) % 2) == 0, jnp.sin(angle), jnp.cos(angle))
    return enc[None].astype(jnp.float32)   # (1, max_len, d_model)


if __name__ == "__main__":
    root = jax.random.PRNGKey(0)
    k_in, k_par = jax.random.split(root)
    kq, kk, kv = jax.random.split(k_in, 3)

    query = jax.random.normal(kq, (BATCH, SEQ, D_MODEL), jnp.float32)
    key_t = jax.random.normal(kk, (BATCH, SEQ, D_MODEL), jnp.float32)
    value = jax.random.normal(kv, (BATCH, SEQ, D_MODEL), jnp.float32)

    lengths = jnp.array([SEQ, SEQ - 2])
    mask = jnp.arange(SEQ)[None, None, :] >= lengths[:, None, None]   # (B, 1, T) bool
    encoding = _sinusoidal_encoding(MAX_LEN, D_MODEL)                 # (1, max_len, D)
    params = _make_params(k_par)

    run = jax.jit(conformer_mhsa_pallas)
    out, attn = run(query, key_t, value, mask, encoding, params)
    out, attn = jax.block_until_ready((out, attn))

    ref_out, ref_attn = conformer_mhsa_reference(query, key_t, value, mask, encoding, params)
    np.testing.assert_allclose(np.asarray(attn), np.asarray(ref_attn), rtol=2e-2, atol=2e-2)
    np.testing.assert_allclose(np.asarray(out), np.asarray(ref_out), rtol=2e-2, atol=2e-2)

    print("KERNEL_OK")
</pallas_src>

<mosaic_0001>
module attributes {stable_mosaic.version = 11 : i64} {
  func.func @_mhsa_kernel(%arg0: memref<16x128xf32, #tpu.memory_space<vmem>>, %arg1: memref<168x128xf32, #tpu.memory_space<vmem>>, %arg2: memref<64x16xf32, #tpu.memory_space<vmem>>, %arg3: memref<16x32xf32, #tpu.memory_space<vmem>>, %arg4: memref<64x16xf32, #tpu.memory_space<vmem>>) attributes {dimension_semantics = [], scalar_prefetch = 0 : i64, scratch_operands = 0 : i64, tpu.core_type = #tpu.core_type<tc>} {
    %c0 = arith.constant 0 : index
    %c0_0 = arith.constant 0 : index
    %0 = vector.load %arg0[%c0, %c0_0] : memref<16x128xf32, #tpu.memory_space<vmem>>, vector<16x128xf32>
    %c0_1 = arith.constant 0 : index
    %c0_2 = arith.constant 0 : index
    %1 = vector.load %arg1[%c0_1, %c0_2] : memref<168x128xf32, #tpu.memory_space<vmem>>, vector<128x128xf32>
    %cst = arith.constant dense<0.000000e+00> : vector<16x128xf32>
    %2 = tpu.matmul %0, %1, %cst {dimension_numbers = #tpu.dot_dimension_numbers<[1], [0], [0], [1], [0, 0, 1, 1], [], []>} : vector<16x128xf32>, vector<128x128xf32>, vector<16x128xf32> -> vector<16x128xf32>
    %3 = vector.extract_strided_slice %2 {offsets = [0, 0], sizes = [16, 32], strides = [1, 1]} : vector<16x128xf32> to vector<16x32xf32>
    %4 = vector.extract_strided_slice %2 {offsets = [0, 32], sizes = [16, 32], strides = [1, 1]} : vector<16x128xf32> to vector<16x32xf32>
    %5 = vector.extract_strided_slice %2 {offsets = [0, 64], sizes = [16, 32], strides = [1, 1]} : vector<16x128xf32> to vector<16x32xf32>
    %6 = vector.extract_strided_slice %2 {offsets = [0, 96], sizes = [16, 32], strides = [1, 1]} : vector<16x128xf32> to vector<16x32xf32>
    %c128 = arith.constant 128 : index
    %c0_3 = arith.constant 0 : index
    %7 = vector.load %arg1[%c128, %c0_3] : memref<168x128xf32, #tpu.memory_space<vmem>>, vector<32x32xf32>
    %c160 = arith.constant 160 : index
    %c0_4 = arith.constant 0 : index
    %8 = vector.load %arg1[%c160, %c0_4] : memref<168x128xf32, #tpu.memory_space<vmem>>, vector<8x32xf32>
    %9 = vector.extract_strided_slice %8 {offsets = [0, 0], sizes = [1, 32], strides = [1, 1]} : vector<8x32xf32> to vector<1x32xf32>
    %10 = vector.extract_strided_slice %8 {offsets = [1, 0], sizes = [1, 32], strides = [1, 1]} : vector<8x32xf32> to vector<1x32xf32>
    %11 = vector.extract_strided_slice %8 {offsets = [2, 0], sizes = [1, 32], strides = [1, 1]} : vector<8x32xf32> to vector<1x32xf32>
    %12 = tpu.iota {dimensions = array<i32: 0>} : vector<64x32xi32>
    %c4_i32 = arith.constant 4 : i32
    %13 = vector.broadcast %c4_i32 : i32 to vector<64x32xi32>
    %14 = arith.shrsi %12, %13 : vector<64x32xi32>
    %15 = tpu.iota {dimensions = array<i32: 1>} : vector<64x32xi32>
    %c3_i32 = arith.constant 3 : i32
    %16 = vector.broadcast %c3_i32 : i32 to vector<64x32xi32>
    %17 = arith.shrsi %15, %16 : vector<64x32xi32>
    %18 = arith.cmpi eq, %14, %17 : vector<64x32xi32>
    %19 = tpu.concatenate %3, %3, %3, %3 in 0 : vector<16x32xf32>, vector<16x32xf32>, vector<16x32xf32>, vector<16x32xf32> -> vector<64x32xf32>
    %20 = tpu.concatenate %5, %5, %5, %5 in 0 : vector<16x32xf32>, vector<16x32xf32>, vector<16x32xf32>, vector<16x32xf32> -> vector<64x32xf32>
    %21 = vector.broadcast %9 : vector<1x32xf32> to vector<64x32xf32>
    %22 = arith.addf %19, %21 : vector<64x32xf32>
    %cst_5 = arith.constant 0.000000e+00 : f32
    %23 = vector.broadcast %cst_5 : f32 to vector<64x32xf32>
    %24 = arith.select %18, %22, %23 : vector<64x32xi1>, vector<64x32xf32>
    %25 = vector.broadcast %10 : vector<1x32xf32> to vector<64x32xf32>
    %26 = arith.addf %19, %25 : vector<64x32xf32>
    %cst_6 = arith.constant 0.000000e+00 : f32
    %27 = vector.broadcast %cst_6 : f32 to vector<64x32xf32>
    %28 = arith.select %18, %26, %27 : vector<64x32xi1>, vector<64x32xf32>
    %cst_7 = arith.constant 0.000000e+00 : f32
    %29 = vector.broadcast %cst_7 : f32 to vector<64x32xf32>
    %30 = arith.select %18, %20, %29 : vector<64x32xi1>, vector<64x32xf32>
    %cst_8 = arith.constant dense<0.000000e+00> : vector<64x16xf32>
    %31 = tpu.matmul %24, %4, %cst_8 {dimension_numbers = #tpu.dot_dimension_numbers<[1], [1], [0], [0], [0, 0, 1, 0], [], []>} : vector<64x32xf32>, vector<16x32xf32>, vector<64x16xf32> -> vector<64x16xf32>
    %cst_9 = arith.constant dense<0.000000e+00> : vector<64x16xf32>
    %32 = tpu.matmul %28, %6, %cst_9 {dimension_numbers = #tpu.dot_dimension_numbers<[1], [1], [0], [0], [0, 0, 1, 0], [], []>} : vector<64x32xf32>, vector<16x32xf32>, vector<64x16xf32> -> vector<64x16xf32>
    %33 = vector.extract_strided_slice %32 {offsets = [1, 0], sizes = [63, 16], strides = [1, 1]} : vector<64x16xf32> to vector<63x16xf32>
    %34 = vector.extract_strided_slice %32 {offsets = [0, 0], sizes = [1, 16], strides = [1, 1]} : vector<64x16xf32> to vector<1x16xf32>
    %35 = tpu.concatenate %33, %34 in 0 : vector<63x16xf32>, vector<1x16xf32> -> vector<64x16xf32>
    %36 = vector.extract_strided_slice %35 {offsets = [0, 15], sizes = [64, 1], strides = [1, 1]} : vector<64x16xf32> to vector<64x1xf32>
    %37 = vector.extract_strided_slice %35 {offsets = [0, 0], sizes = [64, 15], strides = [1, 1]} : vector<64x16xf32> to vector<64x15xf32>
    %38 = tpu.concatenate %36, %37 in 1 : vector<64x1xf32>, vector<64x15xf32> -> vector<64x16xf32>
    %39 = tpu.concatenate %32, %38 in 0 : vector<64x16xf32>, vector<64x16xf32> -> vector<128x16xf32>
    %40 = tpu.iota {dimensions = array<i32: 0>} : vector<128x16xi32>
    %c7_i32 = arith.constant 7 : i32
    %41 = vector.broadcast %c7_i32 : i32 to vector<128x16xi32>
    %42 = arith.andi %40, %41 : vector<128x16xi32>
    %c1_i32 = arith.constant 1 : i32
    %43 = vector.broadcast %c1_i32 : i32 to vector<128x16xi32>
    %44 = arith.addi %42, %43 : vector<128x16xi32>
    %c7_i32_10 = arith.constant 7 : i32
    %45 = vector.broadcast %c7_i32_10 : i32 to vector<128x16xi32>
    %46 = arith.andi %44, %45 : vector<128x16xi32>
    %c0_i32 = arith.constant 0 : i32
    %47 = vector.broadcast %c0_i32 : i32 to vector<128x16xi32>
    %48 = arith.shrsi %46, %47 : vector<128x16xi32>
    %c1_i32_11 = arith.constant 1 : i32
    %49 = vector.broadcast %c1_i32_11 : i32 to vector<128x16xi32>
    %50 = arith.andi %48, %49 : vector<128x16xi32>
    %c1_i32_12 = arith.constant 1 : i32
    %51 = vector.broadcast %c1_i32_12 : i32 to vector<128x16xi32>
    %52 = arith.cmpi eq, %50, %51 : vector<128x16xi32>
    %53 = vector.extract_strided_slice %39 {offsets = [0, 15], sizes = [128, 1], strides = [1, 1]} : vector<128x16xf32> to vector<128x1xf32>
    %54 = vector.extract_strided_slice %39 {offsets = [0, 0], sizes = [128, 15], strides = [1, 1]} : vector<128x16xf32> to vector<128x15xf32>
    %55 = tpu.concatenate %53, %54 in 1 : vector<128x1xf32>, vector<128x15xf32> -> vector<128x16xf32>
    %56 = arith.select %52, %55, %39 : vector<128x16xi1>, vector<128x16xf32>
    %c1_i32_13 = arith.constant 1 : i32
    %57 = vector.broadcast %c1_i32_13 : i32 to vector<128x16xi32>
    %58 = arith.shrsi %46, %57 : vector<128x16xi32>
    %c1_i32_14 = arith.constant 1 : i32
    %59 = vector.broadcast %c1_i32_14 : i32 to vector<128x16xi32>
    %60 = arith.andi %58, %59 : vector<128x16xi32>
    %c1_i32_15 = arith.constant 1 : i32
    %61 = vector.broadcast %c1_i32_15 : i32 to vector<128x16xi32>
    %62 = arith.cmpi eq, %60, %61 : vector<128x16xi32>
    %63 = vector.extract_strided_slice %56 {offsets = [0, 14], sizes = [128, 2], strides = [1, 1]} : vector<128x16xf32> to vector<128x2xf32>
    %64 = vector.extract_strided_slice %56 {offsets = [0, 0], sizes = [128, 14], strides = [1, 1]} : vector<128x16xf32> to vector<128x14xf32>
    %65 = tpu.concatenate %63, %64 in 1 : vector<128x2xf32>, vector<128x14xf32> -> vector<128x16xf32>
    %66 = arith.select %62, %65, %56 : vector<128x16xi1>, vector<128x16xf32>
    %c2_i32 = arith.constant 2 : i32
    %67 = vector.broadcast %c2_i32 : i32 to vector<128x16xi32>
    %68 = arith.shrsi %46, %67 : vector<128x16xi32>
    %c1_i32_16 = arith.constant 1 : i32
    %69 = vector.broadcast %c1_i32_16 : i32 to vector<128x16xi32>
    %70 = arith.andi %68, %69 : vector<128x16xi32>
    %c1_i32_17 = arith.constant 1 : i32
    %71 = vector.broadcast %c1_i32_17 : i32 to vector<128x16xi32>
    %72 = arith.cmpi eq, %70, %71 : vector<128x16xi32>
    %73 = vector.extract_strided_slice %66 {offsets = [0, 12], sizes = [128, 4], strides = [1, 1]} : vector<128x16xf32> to vector<128x4xf32>
    %74 = vector.extract_strided_slice %66 {offsets = [0, 0], sizes = [128, 12], strides = [1, 1]} : vector<128x16xf32> to vector<128x12xf32>
    %75 = tpu.concatenate %73, %74 in 1 : vector<128x4xf32>, vector<128x12xf32> -> vector<128x16xf32>
    %76 = arith.select %72, %75, %66 : vector<128x16xi1>, vector<128x16xf32>
    %77 = vector.extract_strided_slice %76 {offsets = [0, 0], sizes = [64, 16], strides = [1, 1]} : vector<128x16xf32> to vector<64x16xf32>
    %78 = vector.extract_strided_slice %76 {offsets = [64, 0], sizes = [64, 16], strides = [1, 1]} : vector<128x16xf32> to vector<64x16xf32>
    %79 = tpu.iota {dimensions = array<i32: 0>} : vector<64x16xi32>
    %c7_i32_18 = arith.constant 7 : i32
    %80 = vector.broadcast %c7_i32_18 : i32 to vector<64x16xi32>
    %81 = arith.andi %79, %80 : vector<64x16xi32>
    %82 = tpu.iota {dimensions = array<i32: 1>} : vector<64x16xi32>
    %c7_i32_19 = arith.constant 7 : i32
    %83 = vector.broadcast %c7_i32_19 : i32 to vector<64x16xi32>
    %84 = arith.andi %82, %83 : vector<64x16xi32>
    %85 = arith.cmpi sle, %84, %81 : vector<64x16xi32>
    %c1_i32_20 = arith.constant 1 : i32
    %86 = vector.broadcast %c1_i32_20 : i32 to vector<64x16xi32>
    %87 = arith.addi %81, %86 : vector<64x16xi32>
    %88 = arith.cmpi eq, %84, %87 : vector<64x16xi32>
    %cst_21 = arith.constant 0.000000e+00 : f32
    %89 = vector.broadcast %cst_21 : f32 to vector<64x16xf32>
    %90 = arith.select %88, %89, %78 : vector<64x16xi1>, vector<64x16xf32>
    %91 = arith.select %85, %77, %90 : vector<64x16xi1>, vector<64x16xf32>
    %92 = arith.addf %31, %91 : vector<64x16xf32>
    %c0_22 = arith.constant 0 : index
    %c0_23 = arith.constant 0 : index
    %93 = vector.load %arg2[%c0_22, %c0_23] : memref<64x16xf32, #tpu.memory_space<vmem>>, vector<64x16xf32>
    %94 = arith.addf %92, %93 : vector<64x16xf32>
    %cst_24 = arith.constant dense<0xFF800000> : vector<64xf32>
    %95 = vector.multi_reduction <maximumf>, %94, %cst_24 [1] : vector<64x16xf32> to vector<64xf32>
    %96 = vector.shape_cast %95 : vector<64xf32> to vector<64x1xf32>
    %97 = vector.broadcast %96 : vector<64x1xf32> to vector<64x16xf32>
    %98 = arith.subf %94, %97 : vector<64x16xf32>
    %99 = math.exp %98 : vector<64x16xf32>
    %cst_25 = arith.constant dense<0.000000e+00> : vector<64xf32>
    %100 = vector.multi_reduction <add>, %99, %cst_25 [1] : vector<64x16xf32> to vector<64xf32>
    %101 = vector.shape_cast %100 : vector<64xf32> to vector<64x1xf32>
    %102 = tpu.reciprocal %101 : vector<64x1xf32> -> vector<64x1xf32>
    %103 = vector.broadcast %102 : vector<64x1xf32> to vector<64x16xf32>
    %104 = arith.mulf %99, %103 : vector<64x16xf32>
    %c0_26 = arith.constant 0 : index
    %c0_27 = arith.constant 0 : index
    %105 = vector.load %arg4[%c0_26, %c0_27] : memref<64x16xf32, #tpu.memory_space<vmem>>, vector<64x16xf32>
    tpu.vector_store %arg4[%c0_26, %c0_27], %104 {strides = array<i32>} : memref<64x16xf32, #tpu.memory_space<vmem>>, vector<64x16xf32>,
    %106 = vector.extract_strided_slice %104 {offsets = [0, 0], sizes = [16, 16], strides = [1, 1]} : vector<64x16xf32> to vector<16x16xf32>
    %107 = vector.extract_strided_slice %104 {offsets = [16, 0], sizes = [16, 16], strides = [1, 1]} : vector<64x16xf32> to vector<16x16xf32>
    %108 = vector.extract_strided_slice %104 {offsets = [32, 0], sizes = [16, 16], strides = [1, 1]} : vector<64x16xf32> to vector<16x16xf32>
    %109 = vector.extract_strided_slice %104 {offsets = [48, 0], sizes = [16, 16], strides = [1, 1]} : vector<64x16xf32> to vector<16x16xf32>
    %110 = tpu.concatenate %106, %107, %108, %109 in 1 : vector<16x16xf32>, vector<16x16xf32>, vector<16x16xf32>, vector<16x16xf32> -> vector<16x64xf32>
    %cst_28 = arith.constant dense<0.000000e+00> : vector<16x32xf32>
    %111 = tpu.matmul %110, %30, %cst_28 {dimension_numbers = #tpu.dot_dimension_numbers<[1], [0], [0], [1], [0, 0, 1, 1], [], []>} : vector<16x64xf32>, vector<64x32xf32>, vector<16x32xf32> -> vector<16x32xf32>
    %cst_29 = arith.constant dense<0.000000e+00> : vector<16x32xf32>
    %112 = tpu.matmul %111, %7, %cst_29 {dimension_numbers = #tpu.dot_dimension_numbers<[1], [0], [0], [1], [0, 0, 1, 1], [], []>} : vector<16x32xf32>, vector<32x32xf32>, vector<16x32xf32> -> vector<16x32xf32>
    %113 = vector.broadcast %11 : vector<1x32xf32> to vector<16x32xf32>
    %114 = arith.addf %112, %113 : vector<16x32xf32>
    %c0_30 = arith.constant 0 : index
    %c0_31 = arith.constant 0 : index
    %115 = vector.load %arg3[%c0_30, %c0_31] : memref<16x32xf32, #tpu.memory_space<vmem>>, vector<16x32xf32>
    tpu.vector_store %arg3[%c0_30, %c0_31], %114 {strides = array<i32>} : memref<16x32xf32, #tpu.memory_space<vmem>>, vector<16x32xf32>,
    return
  }
}

</mosaic_0001>

<llo_original>
// kernel: conformer_mhsa_pallas.1
$region0: #{conformer_mhsa_pallas.1}
  #allocation0 [shape = 'u32[]', space=smem, size = 0x4, offset = 0x4, fixed_abs, tag = 'smem constant byte address 0x4 - core index']
  #allocation1 [shape = 'u32[144,128]{1,0:T(1,128)}', space=vmem, size = 0x12000, scoped, tag = 'internal scratch']
  %s0 = inlined_call_operand.vmem [shape: f32[16,128], index: 0, kind: input, shape index: {}]
  %s1 = inlined_call_operand.vmem [shape: f32[168,128], index: 1, kind: input, shape index: {}]
  %s2 = inlined_call_operand.vmem [shape: f32[64,16], index: 2, kind: input, shape index: {}]
  %s3 = inlined_call_operand.hbm [shape: f32[16,32], index: 3, kind: output, shape index: {0}]
  %s4 = inlined_call_operand.vmem [shape: f32[64,16], index: 4, kind: output, shape index: {1}]
  %5 = xla_tuple %s3, %s4
  %s6 = sld [smem:[#allocation0]]
  $region30: #{conformer_mhsa_pallas.1} parent=0
    _
  %s8 = ssub.s32 1, %s6
  %s9 = scalar_select 0, %s8, %s6
  $region1: #{conformer_mhsa_pallas.1} parent=0
    #allocation2 [shape = 'u8[8192]{0}', space=vmem, size = 0x2000, scoped, tag = 'output window, operand 0, single buffered']
    #allocation3 [shape = 's32[1]{0}', space=sflag, size = 0x4, scoped, tag = 'scoped memory for conformer_mhsa_pallas.1']
    %10 = vsyncpa [#allocation3], 0
    // Predicated region
    $region2: #{conformer_mhsa_pallas.1} parent=1 // pred_check
      _
    $region3: #{conformer_mhsa_pallas.1} parent=1 // pred_check_branch
      %12 = sbr.rel (0) target = $region5
    $region4: #{conformer_mhsa_pallas.1} parent=1 // pred_region
      _
    $region5: #{conformer_mhsa_pallas.1} parent=1 // pred_fallthru
      _
    // Predicated region
    $region6: #{conformer_mhsa_pallas.1} parent=1 // pred_check
      _
    $region7: #{conformer_mhsa_pallas.1} parent=1 // pred_check_branch
      %14 = sbr.rel (0) target = $region9
    $region8: #{conformer_mhsa_pallas.1} parent=1 // pred_region
      _
    $region9: #{conformer_mhsa_pallas.1} parent=1 // pred_fallthru
      _
    // Predicated region
    $region10: #{conformer_mhsa_pallas.1} parent=1 // pred_check
      _
    $region11: #{conformer_mhsa_pallas.1} parent=1 // pred_check_branch
      %16 = sbr.rel (0) target = $region13
    $region12: #{conformer_mhsa_pallas.1} parent=1 // pred_region
      _
    $region13: #{conformer_mhsa_pallas.1} parent=1 // pred_fallthru
      _
    %v17 = vld [vmem:[%s0] sm:$0xff]
    %v18 = vld [vmem:[%s0 + $0x8] sm:$0xff]
    %v19 = vld [vmem:[%s1] sm:$0xff]
    %v20 = vld [vmem:[%s1 + $0x8] sm:$0xff]
    %v21 = vld [vmem:[%s1 + $0x10] sm:$0xff]
    %v22 = vld [vmem:[%s1 + $0x18] sm:$0xff]
    %v23 = vld [vmem:[%s1 + $0x20] sm:$0xff]
    %v24 = vld [vmem:[%s1 + $0x28] sm:$0xff]
    %v25 = vld [vmem:[%s1 + $0x30] sm:$0xff]
    %v26 = vld [vmem:[%s1 + $0x38] sm:$0xff]
    %v27 = vld [vmem:[%s1 + $0x40] sm:$0xff]
    %v28 = vld [vmem:[%s1 + $0x48] sm:$0xff]
    %v29 = vld [vmem:[%s1 + $0x50] sm:$0xff]
    %v30 = vld [vmem:[%s1 + $0x58] sm:$0xff]
    %v31 = vld [vmem:[%s1 + $0x60] sm:$0xff]
    %v32 = vld [vmem:[%s1 + $0x68] sm:$0xff]
    %v33 = vld [vmem:[%s1 + $0x70] sm:$0xff]
    %v34 = vld [vmem:[%s1 + $0x78] sm:$0xff]
    %35 = vmatprep.subr.mxu0 0.0
    %36 = vmatpush1.msra.mxu0 %v19
    %37 = vmatprep.subr.mxu0 0.0
    %38 = vmatpush1.msra.mxu0 %v20
    %39 = vmatprep.subr.mxu0 0.0
    %40 = vmatpush1.msra.mxu0 %v21
    %41 = vmatprep.subr.mxu0 0.0
    %42 = vmatpush1.msra.mxu0 %v22
    %43 = vmatprep.subr.mxu0 0.0
    %44 = vmatpush1.msra.mxu0 %v23
    %45 = vmatprep.subr.mxu0 0.0
    %46 = vmatpush1.msra.mxu0 %v24
    %47 = vmatprep.subr.mxu0 0.0
    %48 = vmatpush1.msra.mxu0 %v25
    %49 = vmatprep.subr.mxu0 0.0
    %50 = vmatpush1.msra.mxu0 %v26
    %51 = vmatprep.subr.mxu0 0.0
    %52 = vmatpush1.msra.mxu0 %v27
    %53 = vmatprep.subr.mxu0 0.0
    %54 = vmatpush1.msra.mxu0 %v28
    %55 = vmatprep.subr.mxu0 0.0
    %56 = vmatpush1.msra.mxu0 %v29
    %57 = vmatprep.subr.mxu0 0.0
    %58 = vmatpush1.msra.mxu0 %v30
    %59 = vmatprep.subr.mxu0 0.0
    %60 = vmatpush1.msra.mxu0 %v31
    %61 = vmatprep.subr.mxu0 0.0
    %62 = vmatpush1.msra.mxu0 %v32
    %63 = vmatprep.subr.mxu0 0.0
    %64 = vmatpush1.msra.mxu0 %v33
    %65 = vmatprep.subr.mxu0 0.0
    %66 = vmatpush1.msra.mxu0 %v34
    %67 = vmatprep.subr.mxu0 0.0
    %68 = vmatpush1.msra.mxu0 0.0
    %69 = vmatprep.subr.mxu0 0.0
    %70 = vmatpush1.msra.mxu0 0.0
    %71 = vmatprep.subr.mxu0 0.0
    %72 = vmatpush1.msra.mxu0 0.0
    %73 = vmatprep.subr.mxu0 0.0
    %74 = vmatpush1.msra.mxu0 0.0
    %75 = vmatprep.subr.mxu0 0.0
    %76 = vmatpush1.msra.mxu0 0.0
    %77 = vmatprep.subr.mxu0 0.0
    %78 = vmatpush1.msra.mxu0 0.0
    %79 = vmatprep.subr.mxu0 0.0
    %80 = vmatpush1.msra.mxu0 0.0
    %81 = vmatprep.subr.mxu0 0.0
    %82 = vmatpush1.msra.mxu0 0.0
    %83 = vmatprep.subr.mxu0 0.0
    %84 = vmatpush1.msra.mxu0 0.0
    %85 = vmatprep.subr.mxu0 0.0
    %86 = vmatpush1.msra.mxu0 0.0
    %87 = vmatprep.subr.mxu0 0.0
    %88 = vmatpush1.msra.mxu0 0.0
    %89 = vmatprep.subr.mxu0 0.0
    %90 = vmatpush1.msra.mxu0 0.0
    %91 = vmatprep.subr.mxu0 0.0
    %92 = vmatpush1.msra.mxu0 0.0
    %93 = vmatprep.subr.mxu0 0.0
    %94 = vmatpush1.msra.mxu0 0.0
    %95 = vmatprep.subr.mxu0 0.0
    %96 = vmatpush1.msra.mxu0 0.0
    %97 = vmatprep.subr.mxu0 0.0
    %98 = vmatpush1.msra.mxu0 0.0
    %99 = vmatprep.mubr.f32.mxu0 0.0
    %100 = vmatmul.mubr.f32.gmra.mrb[0].mxu0 %v17
    %v101 = vpop.f32.mrb[0].mxu0
    %v102 = vadd.f32 0.0, %v101
    %v103 = vpop.f32.mrb[0].mxu0
    %104 = vmatprep.mubr.f32.mxu0 0.0
    %105 = vmatmul.mubr.f32.gmra.mrb[0].mxu0 %v18
    %v106 = vpop.f32.mrb[0].mxu0
    %v107 = vadd.f32 0.0, %v106
    %v108 = vpop.f32.mrb[0].mxu0
    %109 = vdwg.mxu0
    %v110 = vld [vmem:[%s1 + $0x80] sm:$0xff]
    %v111 = vld [vmem:[%s1 + $0x88] sm:$0xff]
    %v112 = vld [vmem:[%s1 + $0x90] sm:$0xff]
    %v113 = vld [vmem:[%s1 + $0x98] sm:$0xff]
    %v114 = vld [vmem:[%s1 + $0xa0] sm:$0xff]
    %v115 = vlaneseq
    %v116 = vshrl.u32 %v115, 7
    %v117 = vadd.s32 %v116, 8
    %v118 = vadd.s32 %v116, 16
    %v119 = vadd.s32 %v116, 24
    %v120 = vadd.s32 %v116, 32
    %v121 = vadd.s32 %v116, 40
    %v122 = vadd.s32 %v116, 48
    %v123 = vadd.s32 %v116, 56
    %v124 = vshra.s32 %v116, 4
    %v125 = vshra.s32 %v117, 4
    %v126 = vshra.s32 %v118, 4
    %v127 = vshra.s32 %v119, 4
    %v128 = vshra.s32 %v120, 4
    %v129 = vshra.s32 %v121, 4
    %v130 = vshra.s32 %v122, 4
    %v131 = vshra.s32 %v123, 4
    %v132 = vlaneseq
    %v133 = vand.u32 %v132, 127
    %v134 = vshra.s32 %v133, 3
    %vm135 = vcmp.eq.s32.totalorder %v124, %v134
    %vm136 = vcmp.eq.s32.totalorder %v125, %v134
    %vm137 = vcmp.eq.s32.totalorder %v126, %v134
    %vm138 = vcmp.eq.s32.totalorder %v127, %v134
    %vm139 = vcmp.eq.s32.totalorder %v128, %v134
    %vm140 = vcmp.eq.s32.totalorder %v129, %v134
    %vm141 = vcmp.eq.s32.totalorder %v130, %v134
    %vm142 = vcmp.eq.s32.totalorder %v131, %v134
    %v143 = vlaneseq
    %v144 = vshrl.u32 %v143, 7
    %v145 = vsub.s32 0, %v144
    %v146 = vrot.slane %v114, %v145
    %v147 = vadd.f32 %v102, %v146
    %v148 = vadd.f32 %v107, %v146
    %v149 = vsel %vm135, %v147, 0.0
    %v150 = vsel %vm136, %v148, 0.0
    %v151 = vsel %vm137, %v147, 0.0
    %v152 = vsel %vm138, %v148, 0.0
    %v153 = vsel %vm139, %v147, 0.0
    %v154 = vsel %vm140, %v148, 0.0
    %v155 = vsel %vm141, %v147, 0.0
    %v156 = vsel %vm142, %v148, 0.0
    %v157 = vlaneseq
    %v158 = vshrl.u32 %v157, 7
    %v159 = vsub.s32 1, %v158
    %v160 = vrot.slane %v114, %v159
    %v161 = vadd.f32 %v102, %v160
    %v162 = vadd.f32 %v107, %v160
    %v163 = vsel %vm135, %v161, 0.0
    %v164 = vsel %vm136, %v162, 0.0
    %v165 = vsel %vm137, %v161, 0.0
    %v166 = vsel %vm138, %v162, 0.0
    %v167 = vsel %vm139, %v161, 0.0
    %v168 = vsel %vm140, %v162, 0.0
    %v169 = vsel %vm141, %v161, 0.0
    %v170 = vsel %vm142, %v162, 0.0
    %173 = vrot.lane.b32.xlu0 %v102, 64
    %v174 = vpop.permute.xlu0 %173
    %175 = vrot.lane.b32.xlu0 %v107, 64
    %v176 = vpop.permute.xlu0 %175
    %v179 = vsel %vm135, %v174, 0.0
    %v180 = vsel %vm136, %v176, 0.0
    %v181 = vsel %vm137, %v174, 0.0
    %v182 = vsel %vm138, %v176, 0.0
    %v183 = vsel %vm139, %v174, 0.0
    %v184 = vsel %vm140, %v176, 0.0
    %v185 = vsel %vm141, %v174, 0.0
    %v186 = vsel %vm142, %v176, 0.0
    %187 = vrot.lane.b32.xlu0 %v102, 32
    %v188 = vpop.permute.xlu0 %187
    %189 = vrot.lane.b32.xlu0 %v107, 32
    %v190 = vpop.permute.xlu0 %189
    %vm191 = vcmask 261120
    %v193 = vsel %vm191, %v163, 0
    %v196 = vsel %vm191, %v164, 0
    %v199 = vsel %vm191, %v165, 0
    %v202 = vsel %vm191, %v166, 0
    %v205 = vsel %vm191, %v167, 0
    %v208 = vsel %vm191, %v168, 0
    %v211 = vsel %vm191, %v169, 0
    %v214 = vsel %vm191, %v170, 0
    %v216 = vsel %vm191, %v188, 0
    %v218 = vsel %vm191, %v190, 0
    %220 = vmatprep.subr.mxu0 0.0
    %221 = vmatpush1.xpose.msra.mxu0 %v216
    %222 = vmatprep.subr.mxu0 0.0
    %223 = vmatpush1.xpose.msra.mxu0 %v218
    %224 = vmatprep.subr.mxu0 0.0
    %225 = vmatpush1.xpose.msra.mxu0 0.0
    %226 = vmatprep.subr.mxu0 0.0
    %227 = vmatpush1.xpose.msra.mxu0 0.0
    %228 = vmatprep.subr.mxu0 0.0
    %229 = vmatpush1.xpose.msra.mxu0 0.0
    %230 = vmatprep.subr.mxu0 0.0
    %231 = vmatpush1.xpose.msra.mxu0 0.0
    %232 = vmatprep.subr.mxu0 0.0
    %233 = vmatpush1.xpose.msra.mxu0 0.0
    %234 = vmatprep.subr.mxu0 0.0
    %235 = vmatpush1.xpose.msra.mxu0 0.0
    %236 = vmatprep.subr.mxu0 0.0
    %237 = vmatpush1.xpose.msra.mxu0 0.0
    %238 = vmatprep.subr.mxu0 0.0
    %239 = vmatpush1.xpose.msra.mxu0 0.0
    %240 = vmatprep.subr.mxu0 0.0
    %241 = vmatpush1.xpose.msra.mxu0 0.0
    %242 = vmatprep.subr.mxu0 0.0
    %243 = vmatpush1.xpose.msra.mxu0 0.0
    %244 = vmatprep.subr.mxu0 0.0
    %245 = vmatpush1.xpose.msra.mxu0 0.0
    %246 = vmatprep.subr.mxu0 0.0
    %247 = vmatpush1.xpose.msra.mxu0 0.0
    %248 = vmatprep.subr.mxu0 0.0
    %249 = vmatpush1.xpose.msra.mxu0 0.0
    %250 = vmatprep.subr.mxu0 0.0
    %251 = vmatpush1.xpose.msra.mxu0 0.0
    %252 = vmatprep.subr.mxu0 0.0
    %253 = vmatpush1.xpose.msra.mxu0 0.0
    %254 = vmatprep.subr.mxu0 0.0
    %255 = vmatpush1.xpose.msra.mxu0 0.0
    %256 = vmatprep.subr.mxu0 0.0
    %257 = vmatpush1.xpose.msra.mxu0 0.0
    %258 = vmatprep.subr.mxu0 0.0
    %259 = vmatpush1.xpose.msra.mxu0 0.0
    %260 = vmatprep.subr.mxu0 0.0
    %261 = vmatpush1.xpose.msra.mxu0 0.0
    %262 = vmatprep.subr.mxu0 0.0
    %263 = vmatpush1.xpose.msra.mxu0 0.0
    %264 = vmatprep.subr.mxu0 0.0
    %265 = vmatpush1.xpose.msra.mxu0 0.0
    %266 = vmatprep.subr.mxu0 0.0
    %267 = vmatpush1.xpose.msra.mxu0 0.0
    %268 = vmatprep.subr.mxu0 0.0
    %269 = vmatpush1.xpose.msra.mxu0 0.0
    %270 = vmatprep.subr.mxu0 0.0
    %271 = vmatpush1.xpose.msra.mxu0 0.0
    %272 = vmatprep.subr.mxu0 0.0
    %273 = vmatpush1.xpose.msra.mxu0 0.0
    %274 = vmatprep.subr.mxu0 0.0
    %275 = vmatpush1.xpose.msra.mxu0 0.0
    %276 = vmatprep.subr.mxu0 0.0
    %277 = vmatpush1.xpose.msra.mxu0 0.0
    %278 = vmatprep.subr.mxu0 0.0
    %279 = vmatpush1.xpose.msra.mxu0 0.0
    %280 = vmatprep.subr.mxu0 0.0
    %281 = vmatpush1.xpose.msra.mxu0 0.0
    %282 = vmatprep.subr.mxu0 0.0
    %283 = vmatpush1.xpose.msra.mxu0 0.0
    %284 = vmatprep.mubr.f32.mxu0 0.0
    %285 = vmatmul.mubr.f32.gmra.mrb[0].mxu0 %v193
    %v286 = vpop.f32.mrb[0].mxu0
    %v287 = vadd.f32 0.0, %v286
    %v288 = vpop.f32.mrb[0].mxu0
    %289 = vmatprep.mubr.f32.mxu0 0.0
    %290 = vmatmul.mubr.f32.gmra.mrb[0].mxu0 %v196
    %v291 = vpop.f32.mrb[0].mxu0
    %v292 = vadd.f32 0.0, %v291
    %v293 = vpop.f32.mrb[0].mxu0
    %294 = vmatprep.mubr.f32.mxu0 0.0
    %295 = vmatmul.mubr.f32.gmra.mrb[0].mxu0 %v199
    %v296 = vpop.f32.mrb[0].mxu0
    %v297 = vadd.f32 0.0, %v296
    %v298 = vpop.f32.mrb[0].mxu0
    %299 = vmatprep.mubr.f32.mxu0 0.0
    %300 = vmatmul.mubr.f32.gmra.mrb[0].mxu0 %v202
    %v301 = vpop.f32.mrb[0].mxu0
    %v302 = vadd.f32 0.0, %v301
    %v303 = vpop.f32.mrb[0].mxu0
    %304 = vmatprep.mubr.f32.mxu0 0.0
    %305 = vmatmul.mubr.f32.gmra.mrb[0].mxu0 %v205
    %v306 = vpop.f32.mrb[0].mxu0
    %v307 = vadd.f32 0.0, %v306
    %v308 = vpop.f32.mrb[0].mxu0
    %309 = vmatprep.mubr.f32.mxu0 0.0
    %310 = vmatmul.mubr.f32.gmra.mrb[0].mxu0 %v208
    %v311 = vpop.f32.mrb[0].mxu0
    %v312 = vadd.f32 0.0, %v311
    %v313 = vpop.f32.mrb[0].mxu0
    %314 = vmatprep.mubr.f32.mxu0 0.0
    %315 = vmatmul.mubr.f32.gmra.mrb[0].mxu0 %v211
    %v316 = vpop.f32.mrb[0].mxu0
    %v317 = vadd.f32 0.0, %v316
    %v318 = vpop.f32.mrb[0].mxu0
    %319 = vmatprep.mubr.f32.mxu0 0.0
    %320 = vmatmul.mubr.f32.gmra.mrb[0].mxu0 %v214
    %v321 = vpop.f32.mrb[0].mxu0
    %v322 = vadd.f32 0.0, %v321
    %v323 = vpop.f32.mrb[0].mxu0
    %324 = vdwg.mxu0
    %vm333 = vcmask 1046528
    %v334 = vrot.slane %v287, 1
    %v335 = vrot.slane %v292, 1
    %v336 = vsel %vm333, %v334, %v335
    %v337 = vrot.slane %v297, 1
    %v338 = vsel %vm333, %v335, %v337
    %v339 = vrot.slane %v302, 1
    %v340 = vsel %vm333, %v337, %v339
    %v341 = vrot.slane %v307, 1
    %v342 = vsel %vm333, %v339, %v341
    %v343 = vrot.slane %v312, 1
    %v344 = vsel %vm333, %v341, %v343
    %v345 = vrot.slane %v317, 1
    %v346 = vsel %vm333, %v343, %v345
    %v347 = vrot.slane %v322, 1
    %v348 = vsel %vm333, %v345, %v347
    %v351 = vsel %vm333, %v347, %v334
    %353 = vrot.lane.b32.xlu0 %v336, 113
    %v354 = vpop.permute.xlu0 %353
    %355 = vrot.lane.b32.xlu0 %v338, 113
    %v356 = vpop.permute.xlu0 %355
    %357 = vrot.lane.b32.xlu0 %v340, 113
    %v358 = vpop.permute.xlu0 %357
    %359 = vrot.lane.b32.xlu0 %v342, 113
    %v360 = vpop.permute.xlu0 %359
    %361 = vrot.lane.b32.xlu0 %v344, 113
    %v362 = vpop.permute.xlu0 %361
    %363 = vrot.lane.b32.xlu0 %v346, 113
    %v364 = vpop.permute.xlu0 %363
    %365 = vrot.lane.b32.xlu0 %v348, 113
    %v366 = vpop.permute.xlu0 %365
    %367 = vrot.lane.b32.xlu0 %v351, 113
    %v368 = vpop.permute.xlu0 %367
    %377 = vrot.lane.b32.xlu0 %v336, 1
    %v378 = vpop.permute.xlu0 %377
    %379 = vrot.lane.b32.xlu0 %v338, 1
    %v380 = vpop.permute.xlu0 %379
    %381 = vrot.lane.b32.xlu0 %v340, 1
    %v382 = vpop.permute.xlu0 %381
    %383 = vrot.lane.b32.xlu0 %v342, 1
    %v384 = vpop.permute.xlu0 %383
    %385 = vrot.lane.b32.xlu0 %v344, 1
    %v386 = vpop.permute.xlu0 %385
    %387 = vrot.lane.b32.xlu0 %v346, 1
    %v388 = vpop.permute.xlu0 %387
    %389 = vrot.lane.b32.xlu0 %v348, 1
    %v390 = vpop.permute.xlu0 %389
    %391 = vrot.lane.b32.xlu0 %v351, 1
    %v392 = vpop.permute.xlu0 %391
    %vm401 = vcmask 7168
    %v402 = vsel %vm401, %v354, %v378
    %v403 = vsel %vm401, %v356, %v380
    %v404 = vsel %vm401, %v358, %v382
    %v405 = vsel %vm401, %v360, %v384
    %v406 = vsel %vm401, %v362, %v386
    %v407 = vsel %vm401, %v364, %v388
    %v408 = vsel %vm401, %v366, %v390
    %v409 = vsel %vm401, %v368, %v392
    %v410 = vadd.s32 %v116, 64
    %v411 = vadd.s32 %v116, 72
    %v412 = vadd.s32 %v116, 80
    %v413 = vadd.s32 %v116, 88
    %v414 = vadd.s32 %v116, 96
    %v415 = vadd.s32 %v116, 104
    %v416 = vadd.s32 %v116, 112
    %v417 = vadd.s32 %v116, 120
    %v418 = vand.u32 %v116, 7
    %v419 = vand.u32 %v117, 7
    %v420 = vand.u32 %v118, 7
    %v421 = vand.u32 %v119, 7
    %v422 = vand.u32 %v120, 7
    %v423 = vand.u32 %v121, 7
    %v424 = vand.u32 %v122, 7
    %v425 = vand.u32 %v123, 7
    %v426 = vand.u32 %v410, 7
    %v427 = vand.u32 %v411, 7
    %v428 = vand.u32 %v412, 7
    %v429 = vand.u32 %v413, 7
    %v430 = vand.u32 %v414, 7
    %v431 = vand.u32 %v415, 7
    %v432 = vand.u32 %v416, 7
    %v433 = vand.u32 %v417, 7
    %v434 = vadd.s32 %v418, 1
    %v435 = vadd.s32 %v419, 1
    %v436 = vadd.s32 %v420, 1
    %v437 = vadd.s32 %v421, 1
    %v438 = vadd.s32 %v422, 1
    %v439 = vadd.s32 %v423, 1
    %v440 = vadd.s32 %v424, 1
    %v441 = vadd.s32 %v425, 1
    %v442 = vadd.s32 %v426, 1
    %v443 = vadd.s32 %v427, 1
    %v444 = vadd.s32 %v428, 1
    %v445 = vadd.s32 %v429, 1
    %v446 = vadd.s32 %v430, 1
    %v447 = vadd.s32 %v431, 1
    %v448 = vadd.s32 %v432, 1
    %v449 = vadd.s32 %v433, 1
    %v450 = vand.u32 %v434, 7
    %v451 = vand.u32 %v435, 7
    %v452 = vand.u32 %v436, 7
    %v453 = vand.u32 %v437, 7
    %v454 = vand.u32 %v438, 7
    %v455 = vand.u32 %v439, 7
    %v456 = vand.u32 %v440, 7
    %v457 = vand.u32 %v441, 7
    %v458 = vand.u32 %v442, 7
    %v459 = vand.u32 %v443, 7
    %v460 = vand.u32 %v444, 7
    %v461 = vand.u32 %v445, 7
    %v462 = vand.u32 %v446, 7
    %v463 = vand.u32 %v447, 7
    %v464 = vand.u32 %v448, 7
    %v465 = vand.u32 %v449, 7
    %v466 = vand.u32 %v450, 1
    %v467 = vand.u32 %v451, 1
    %v468 = vand.u32 %v452, 1
    %v469 = vand.u32 %v453, 1
    %v470 = vand.u32 %v454, 1
    %v471 = vand.u32 %v455, 1
    %v472 = vand.u32 %v456, 1
    %v473 = vand.u32 %v457, 1
    %v474 = vand.u32 %v458, 1
    %v475 = vand.u32 %v459, 1
    %v476 = vand.u32 %v460, 1
    %v477 = vand.u32 %v461, 1
    %v478 = vand.u32 %v462, 1
    %v479 = vand.u32 %v463, 1
    %v480 = vand.u32 %v464, 1
    %v481 = vand.u32 %v465, 1
    %vm482 = vcmp.eq.s32.totalorder %v466, 1
    %vm483 = vcmp.eq.s32.totalorder %v467, 1
    %vm484 = vcmp.eq.s32.totalorder %v468, 1
    %vm485 = vcmp.eq.s32.totalorder %v469, 1
    %vm486 = vcmp.eq.s32.totalorder %v470, 1
    %vm487 = vcmp.eq.s32.totalorder %v471, 1
    %vm488 = vcmp.eq.s32.totalorder %v472, 1
    %vm489 = vcmp.eq.s32.totalorder %v473, 1
    %vm490 = vcmp.eq.s32.totalorder %v474, 1
    %vm491 = vcmp.eq.s32.totalorder %v475, 1
    %vm492 = vcmp.eq.s32.totalorder %v476, 1
    %vm493 = vcmp.eq.s32.totalorder %v477, 1
    %vm494 = vcmp.eq.s32.totalorder %v478, 1
    %vm495 = vcmp.eq.s32.totalorder %v479, 1
    %vm496 = vcmp.eq.s32.totalorder %v480, 1
    %vm497 = vcmp.eq.s32.totalorder %v481, 1
    %506 = vrot.lane.b32.xlu0 %v287, 113
    %v507 = vpop.permute.xlu0 %506
    %508 = vrot.lane.b32.xlu0 %v292, 113
    %v509 = vpop.permute.xlu0 %508
    %510 = vrot.lane.b32.xlu0 %v297, 113
    %v511 = vpop.permute.xlu0 %510
    %512 = vrot.lane.b32.xlu0 %v302, 113
    %v513 = vpop.permute.xlu0 %512
    %514 = vrot.lane.b32.xlu0 %v307, 113
    %v515 = vpop.permute.xlu0 %514
    %516 = vrot.lane.b32.xlu0 %v312, 113
    %v517 = vpop.permute.xlu0 %516
    %518 = vrot.lane.b32.xlu0 %v317, 113
    %v519 = vpop.permute.xlu0 %518
    %520 = vrot.lane.b32.xlu0 %v322, 113
    %v521 = vpop.permute.xlu0 %520
    %522 = vrot.lane.b32.xlu0 %v402, 113
    %v523 = vpop.permute.xlu0 %522
    %524 = vrot.lane.b32.xlu0 %v403, 113
    %v525 = vpop.permute.xlu0 %524
    %526 = vrot.lane.b32.xlu0 %v404, 113
    %v527 = vpop.permute.xlu0 %526
    %528 = vrot.lane.b32.xlu0 %v405, 113
    %v529 = vpop.permute.xlu0 %528
    %530 = vrot.lane.b32.xlu0 %v406, 113
    %v531 = vpop.permute.xlu0 %530
    %532 = vrot.lane.b32.xlu0 %v407, 113
    %v533 = vpop.permute.xlu0 %532
    %534 = vrot.lane.b32.xlu0 %v408, 113
    %v535 = vpop.permute.xlu0 %534
    %536 = vrot.lane.b32.xlu0 %v409, 113
    %v537 = vpop.permute.xlu0 %536
    %554 = vrot.lane.b32.xlu0 %v287, 1
    %v555 = vpop.permute.xlu0 %554
    %556 = vrot.lane.b32.xlu0 %v292, 1
    %v557 = vpop.permute.xlu0 %556
    %558 = vrot.lane.b32.xlu0 %v297, 1
    %v559 = vpop.permute.xlu0 %558
    %560 = vrot.lane.b32.xlu0 %v302, 1
    %v561 = vpop.permute.xlu0 %560
    %562 = vrot.lane.b32.xlu0 %v307, 1
    %v563 = vpop.permute.xlu0 %562
    %564 = vrot.lane.b32.xlu0 %v312, 1
    %v565 = vpop.permute.xlu0 %564
    %566 = vrot.lane.b32.xlu0 %v317, 1
    %v567 = vpop.permute.xlu0 %566
    %568 = vrot.lane.b32.xlu0 %v322, 1
    %v569 = vpop.permute.xlu0 %568
    %570 = vrot.lane.b32.xlu0 %v402, 1
    %v571 = vpop.permute.xlu0 %570
    %572 = vrot.lane.b32.xlu0 %v403, 1
    %v573 = vpop.permute.xlu0 %572
    %574 = vrot.lane.b32.xlu0 %v404, 1
    %v575 = vpop.permute.xlu0 %574
    %576 = vrot.lane.b32.xlu0 %v405, 1
    %v577 = vpop.permute.xlu0 %576
    %578 = vrot.lane.b32.xlu0 %v406, 1
    %v579 = vpop.permute.xlu0 %578
    %580 = vrot.lane.b32.xlu0 %v407, 1
    %v581 = vpop.permute.xlu0 %580
    %582 = vrot.lane.b32.xlu0 %v408, 1
    %v583 = vpop.permute.xlu0 %582
    %584 = vrot.lane.b32.xlu0 %v409, 1
    %v585 = vpop.permute.xlu0 %584
    %v602 = vsel %vm401, %v507, %v555
    %v603 = vsel %vm401, %v509, %v557
    %v604 = vsel %vm401, %v511, %v559
    %v605 = vsel %vm401, %v513, %v561
    %v606 = vsel %vm401, %v515, %v563
    %v607 = vsel %vm401, %v517, %v565
    %v608 = vsel %vm401, %v519, %v567
    %v609 = vsel %vm401, %v521, %v569
    %v610 = vsel %vm401, %v523, %v571
    %v611 = vsel %vm401, %v525, %v573
    %v612 = vsel %vm401, %v527, %v575
    %v613 = vsel %vm401, %v529, %v577
    %v614 = vsel %vm401, %v531, %v579
    %v615 = vsel %vm401, %v533, %v581
    %v616 = vsel %vm401, %v535, %v583
    %v617 = vsel %vm401, %v537, %v585
    %v618 = vsel %vm482, %v602, %v287
    %v619 = vsel %vm483, %v603, %v292
    %v620 = vsel %vm484, %v604, %v297
    %v621 = vsel %vm485, %v605, %v302
    %v622 = vsel %vm486, %v606, %v307
    %v623 = vsel %vm487, %v607, %v312
    %v624 = vsel %vm488, %v608, %v317
    %v625 = vsel %vm489, %v609, %v322
    %v626 = vsel %vm490, %v610, %v402
    %v627 = vsel %vm491, %v611, %v403
    %v628 = vsel %vm492, %v612, %v404
    %v629 = vsel %vm493, %v613, %v405
    %v630 = vsel %vm494, %v614, %v406
    %v631 = vsel %vm495, %v615, %v407
    %v632 = vsel %vm496, %v616, %v408
    %v633 = vsel %vm497, %v617, %v409
    %v634 = vshra.s32 %v450, 1
    %v635 = vshra.s32 %v451, 1
    %v636 = vshra.s32 %v452, 1
    %v637 = vshra.s32 %v453, 1
    %v638 = vshra.s32 %v454, 1
    %v639 = vshra.s32 %v455, 1
    %v640 = vshra.s32 %v456, 1
    %v641 = vshra.s32 %v457, 1
    %v642 = vshra.s32 %v458, 1
    %v643 = vshra.s32 %v459, 1
    %v644 = vshra.s32 %v460, 1
    %v645 = vshra.s32 %v461, 1
    %v646 = vshra.s32 %v462, 1
    %v647 = vshra.s32 %v463, 1
    %v648 = vshra.s32 %v464, 1
    %v649 = vshra.s32 %v465, 1
    %v650 = vand.u32 %v634, 1
    %v651 = vand.u32 %v635, 1
    %v652 = vand.u32 %v636, 1
    %v653 = vand.u32 %v637, 1
    %v654 = vand.u32 %v638, 1
    %v655 = vand.u32 %v639, 1
    %v656 = vand.u32 %v640, 1
    %v657 = vand.u32 %v641, 1
    %v658 = vand.u32 %v642, 1
    %v659 = vand.u32 %v643, 1
    %v660 = vand.u32 %v644, 1
    %v661 = vand.u32 %v645, 1
    %v662 = vand.u32 %v646, 1
    %v663 = vand.u32 %v647, 1
    %v664 = vand.u32 %v648, 1
    %v665 = vand.u32 %v649, 1
    %vm666 = vcmp.eq.s32.totalorder %v650, 1
    %vm667 = vcmp.eq.s32.totalorder %v651, 1
    %vm668 = vcmp.eq.s32.totalorder %v652, 1
    %vm669 = vcmp.eq.s32.totalorder %v653, 1
    %vm670 = vcmp.eq.s32.totalorder %v654, 1
    %vm671 = vcmp.eq.s32.totalorder %v655, 1
    %vm672 = vcmp.eq.s32.totalorder %v656, 1
    %vm673 = vcmp.eq.s32.totalorder %v657, 1
    %vm674 = vcmp.eq.s32.totalorder %v658, 1
    %vm675 = vcmp.eq.s32.totalorder %v659, 1
    %vm676 = vcmp.eq.s32.totalorder %v660, 1
    %vm677 = vcmp.eq.s32.totalorder %v661, 1
    %vm678 = vcmp.eq.s32.totalorder %v662, 1
    %vm679 = vcmp.eq.s32.totalorder %v663, 1
    %vm680 = vcmp.eq.s32.totalorder %v664, 1
    %vm681 = vcmp.eq.s32.totalorder %v665, 1
    %698 = vrot.lane.b32.xlu0 %v618, 114
    %v699 = vpop.permute.xlu0 %698
    %700 = vrot.lane.b32.xlu0 %v619, 114
    %v701 = vpop.permute.xlu0 %700
    %702 = vrot.lane.b32.xlu0 %v620, 114
    %v703 = vpop.permute.xlu0 %702
    %704 = vrot.lane.b32.xlu0 %v621, 114
    %v705 = vpop.permute.xlu0 %704
    %706 = vrot.lane.b32.xlu0 %v622, 114
    %v707 = vpop.permute.xlu0 %706
    %708 = vrot.lane.b32.xlu0 %v623, 114
    %v709 = vpop.permute.xlu0 %708
    %710 = vrot.lane.b32.xlu0 %v624, 114
    %v711 = vpop.permute.xlu0 %710
    %712 = vrot.lane.b32.xlu0 %v625, 114
    %v713 = vpop.permute.xlu0 %712
    %714 = vrot.lane.b32.xlu0 %v626, 114
    %v715 = vpop.permute.xlu0 %714
    %716 = vrot.lane.b32.xlu0 %v627, 114
    %v717 = vpop.permute.xlu0 %716
    %718 = vrot.lane.b32.xlu0 %v628, 114
    %v719 = vpop.permute.xlu0 %718
    %720 = vrot.lane.b32.xlu0 %v629, 114
    %v721 = vpop.permute.xlu0 %720
    %722 = vrot.lane.b32.xlu0 %v630, 114
    %v723 = vpop.permute.xlu0 %722
    %724 = vrot.lane.b32.xlu0 %v631, 114
    %v725 = vpop.permute.xlu0 %724
    %726 = vrot.lane.b32.xlu0 %v632, 114
    %v727 = vpop.permute.xlu0 %726
    %728 = vrot.lane.b32.xlu0 %v633, 114
    %v729 = vpop.permute.xlu0 %728
    %746 = vrot.lane.b32.xlu0 %v618, 2
    %v747 = vpop.permute.xlu0 %746
    %748 = vrot.lane.b32.xlu0 %v619, 2
    %v749 = vpop.permute.xlu0 %748
    %750 = vrot.lane.b32.xlu0 %v620, 2
    %v751 = vpop.permute.xlu0 %750
    %752 = vrot.lane.b32.xlu0 %v621, 2
    %v753 = vpop.permute.xlu0 %752
    %754 = vrot.lane.b32.xlu0 %v622, 2
    %v755 = vpop.permute.xlu0 %754
    %756 = vrot.lane.b32.xlu0 %v623, 2
    %v757 = vpop.permute.xlu0 %756
    %758 = vrot.lane.b32.xlu0 %v624, 2
    %v759 = vpop.permute.xlu0 %758
    %760 = vrot.lane.b32.xlu0 %v625, 2
    %v761 = vpop.permute.xlu0 %760
    %762 = vrot.lane.b32.xlu0 %v626, 2
    %v763 = vpop.permute.xlu0 %762
    %764 = vrot.lane.b32.xlu0 %v627, 2
    %v765 = vpop.permute.xlu0 %764
    %766 = vrot.lane.b32.xlu0 %v628, 2
    %v767 = vpop.permute.xlu0 %766
    %768 = vrot.lane.b32.xlu0 %v629, 2
    %v769 = vpop.permute.xlu0 %768
    %770 = vrot.lane.b32.xlu0 %v630, 2
    %v771 = vpop.permute.xlu0 %770
    %772 = vrot.lane.b32.xlu0 %v631, 2
    %v773 = vpop.permute.xlu0 %772
    %774 = vrot.lane.b32.xlu0 %v632, 2
    %v775 = vpop.permute.xlu0 %774
    %776 = vrot.lane.b32.xlu0 %v633, 2
    %v777 = vpop.permute.xlu0 %776
    %vm794 = vcmask 15360
    %v795 = vsel %vm794, %v699, %v747
    %v796 = vsel %vm794, %v701, %v749
    %v797 = vsel %vm794, %v703, %v751
    %v798 = vsel %vm794, %v705, %v753
    %v799 = vsel %vm794, %v707, %v755
    %v800 = vsel %vm794, %v709, %v757
    %v801 = vsel %vm794, %v711, %v759
    %v802 = vsel %vm794, %v713, %v761
    %v803 = vsel %vm794, %v715, %v763
    %v804 = vsel %vm794, %v717, %v765
    %v805 = vsel %vm794, %v719, %v767
    %v806 = vsel %vm794, %v721, %v769
    %v807 = vsel %vm794, %v723, %v771
    %v808 = vsel %vm794, %v725, %v773
    %v809 = vsel %vm794, %v727, %v775
    %v810 = vsel %vm794, %v729, %v777
    %v811 = vsel %vm666, %v795, %v618
    %v812 = vsel %vm667, %v796, %v619
    %v813 = vsel %vm668, %v797, %v620
    %v814 = vsel %vm669, %v798, %v621
    %v815 = vsel %vm670, %v799, %v622
    %v816 = vsel %vm671, %v800, %v623
    %v817 = vsel %vm672, %v801, %v624
    %v818 = vsel %vm673, %v802, %v625
    %v819 = vsel %vm674, %v803, %v626
    %v820 = vsel %vm675, %v804, %v627
    %v821 = vsel %vm676, %v805, %v628
    %v822 = vsel %vm677, %v806, %v629
    %v823 = vsel %vm678, %v807, %v630
    %v824 = vsel %vm679, %v808, %v631
    %v825 = vsel %vm680, %v809, %v632
    %v826 = vsel %vm681, %v810, %v633
    %v827 = vshra.s32 %v450, 2
    %v828 = vshra.s32 %v451, 2
    %v829 = vshra.s32 %v452, 2
    %v830 = vshra.s32 %v453, 2
    %v831 = vshra.s32 %v454, 2
    %v832 = vshra.s32 %v455, 2
    %v833 = vshra.s32 %v456, 2
    %v834 = vshra.s32 %v457, 2
    %v835 = vshra.s32 %v458, 2
    %v836 = vshra.s32 %v459, 2
    %v837 = vshra.s32 %v460, 2
    %v838 = vshra.s32 %v461, 2
    %v839 = vshra.s32 %v462, 2
    %v840 = vshra.s32 %v463, 2
    %v841 = vshra.s32 %v464, 2
    %v842 = vshra.s32 %v465, 2
    %v843 = vand.u32 %v827, 1
    %v844 = vand.u32 %v828, 1
    %v845 = vand.u32 %v829, 1
    %v846 = vand.u32 %v830, 1
    %v847 = vand.u32 %v831, 1
    %v848 = vand.u32 %v832, 1
    %v849 = vand.u32 %v833, 1
    %v850 = vand.u32 %v834, 1
    %v851 = vand.u32 %v835, 1
    %v852 = vand.u32 %v836, 1
    %v853 = vand.u32 %v837, 1
    %v854 = vand.u32 %v838, 1
    %v855 = vand.u32 %v839, 1
    %v856 = vand.u32 %v840, 1
    %v857 = vand.u32 %v841, 1
    %v858 = vand.u32 %v842, 1
    %vm859 = vcmp.eq.s32.totalorder %v843, 1
    %vm860 = vcmp.eq.s32.totalorder %v844, 1
    %vm861 = vcmp.eq.s32.totalorder %v845, 1
    %vm862 = vcmp.eq.s32.totalorder %v846, 1
    %vm863 = vcmp.eq.s32.totalorder %v847, 1
    %vm864 = vcmp.eq.s32.totalorder %v848, 1
    %vm865 = vcmp.eq.s32.totalorder %v849, 1
    %vm866 = vcmp.eq.s32.totalorder %v850, 1
    %vm867 = vcmp.eq.s32.totalorder %v851, 1
    %vm868 = vcmp.eq.s32.totalorder %v852, 1
    %vm869 = vcmp.eq.s32.totalorder %v853, 1
    %vm870 = vcmp.eq.s32.totalorder %v854, 1
    %vm871 = vcmp.eq.s32.totalorder %v855, 1
    %vm872 = vcmp.eq.s32.totalorder %v856, 1
    %vm873 = vcmp.eq.s32.totalorder %v857, 1
    %vm874 = vcmp.eq.s32.totalorder %v858, 1
    %891 = vrot.lane.b32.xlu0 %v811, 116
    %v892 = vpop.permute.xlu0 %891
    %893 = vrot.lane.b32.xlu0 %v812, 116
    %v894 = vpop.permute.xlu0 %893
    %895 = vrot.lane.b32.xlu0 %v813, 116
    %v896 = vpop.permute.xlu0 %895
    %897 = vrot.lane.b32.xlu0 %v814, 116
    %v898 = vpop.permute.xlu0 %897
    %899 = vrot.lane.b32.xlu0 %v815, 116
    %v900 = vpop.permute.xlu0 %899
    %901 = vrot.lane.b32.xlu0 %v816, 116
    %v902 = vpop.permute.xlu0 %901
    %903 = vrot.lane.b32.xlu0 %v817, 116
    %v904 = vpop.permute.xlu0 %903
    %905 = vrot.lane.b32.xlu0 %v818, 116
    %v906 = vpop.permute.xlu0 %905
    %907 = vrot.lane.b32.xlu0 %v819, 116
    %v908 = vpop.permute.xlu0 %907
    %909 = vrot.lane.b32.xlu0 %v820, 116
    %v910 = vpop.permute.xlu0 %909
    %911 = vrot.lane.b32.xlu0 %v821, 116
    %v912 = vpop.permute.xlu0 %911
    %913 = vrot.lane.b32.xlu0 %v822, 116
    %v914 = vpop.permute.xlu0 %913
    %915 = vrot.lane.b32.xlu0 %v823, 116
    %v916 = vpop.permute.xlu0 %915
    %917 = vrot.lane.b32.xlu0 %v824, 116
    %v918 = vpop.permute.xlu0 %917
    %919 = vrot.lane.b32.xlu0 %v825, 116
    %v920 = vpop.permute.xlu0 %919
    %921 = vrot.lane.b32.xlu0 %v826, 116
    %v922 = vpop.permute.xlu0 %921
    %939 = vrot.lane.b32.xlu0 %v811, 4
    %v940 = vpop.permute.xlu0 %939
    %941 = vrot.lane.b32.xlu0 %v812, 4
    %v942 = vpop.permute.xlu0 %941
    %943 = vrot.lane.b32.xlu0 %v813, 4
    %v944 = vpop.permute.xlu0 %943
    %945 = vrot.lane.b32.xlu0 %v814, 4
    %v946 = vpop.permute.xlu0 %945
    %947 = vrot.lane.b32.xlu0 %v815, 4
    %v948 = vpop.permute.xlu0 %947
    %949 = vrot.lane.b32.xlu0 %v816, 4
    %v950 = vpop.permute.xlu0 %949
    %951 = vrot.lane.b32.xlu0 %v817, 4
    %v952 = vpop.permute.xlu0 %951
    %953 = vrot.lane.b32.xlu0 %v818, 4
    %v954 = vpop.permute.xlu0 %953
    %955 = vrot.lane.b32.xlu0 %v819, 4
    %v956 = vpop.permute.xlu0 %955
    %957 = vrot.lane.b32.xlu0 %v820, 4
    %v958 = vpop.permute.xlu0 %957
    %959 = vrot.lane.b32.xlu0 %v821, 4
    %v960 = vpop.permute.xlu0 %959
    %961 = vrot.lane.b32.xlu0 %v822, 4
    %v962 = vpop.permute.xlu0 %961
    %963 = vrot.lane.b32.xlu0 %v823, 4
    %v964 = vpop.permute.xlu0 %963
    %965 = vrot.lane.b32.xlu0 %v824, 4
    %v966 = vpop.permute.xlu0 %965
    %967 = vrot.lane.b32.xlu0 %v825, 4
    %v968 = vpop.permute.xlu0 %967
    %969 = vrot.lane.b32.xlu0 %v826, 4
    %v970 = vpop.permute.xlu0 %969
    %vm987 = vcmask 31744
    %v988 = vsel %vm987, %v892, %v940
    %v989 = vsel %vm987, %v894, %v942
    %v990 = vsel %vm987, %v896, %v944
    %v991 = vsel %vm987, %v898, %v946
    %v992 = vsel %vm987, %v900, %v948
    %v993 = vsel %vm987, %v902, %v950
    %v994 = vsel %vm987, %v904, %v952
    %v995 = vsel %vm987, %v906, %v954
    %v996 = vsel %vm987, %v908, %v956
    %v997 = vsel %vm987, %v910, %v958
    %v998 = vsel %vm987, %v912, %v960
    %v999 = vsel %vm987, %v914, %v962
    %v1000 = vsel %vm987, %v916, %v964
    %v1001 = vsel %vm987, %v918, %v966
    %v1002 = vsel %vm987, %v920, %v968
    %v1003 = vsel %vm987, %v922, %v970
    %v1004 = vsel %vm859, %v988, %v811
    %v1005 = vsel %vm860, %v989, %v812
    %v1006 = vsel %vm861, %v990, %v813
    %v1007 = vsel %vm862, %v991, %v814
    %v1008 = vsel %vm863, %v992, %v815
    %v1009 = vsel %vm864, %v993, %v816
    %v1010 = vsel %vm865, %v994, %v817
    %v1011 = vsel %vm866, %v995, %v818
    %v1012 = vsel %vm867, %v996, %v819
    %v1013 = vsel %vm868, %v997, %v820
    %v1014 = vsel %vm869, %v998, %v821
    %v1015 = vsel %vm870, %v999, %v822
    %v1016 = vsel %vm871, %v1000, %v823
    %v1017 = vsel %vm872, %v1001, %v824
    %v1018 = vsel %vm873, %v1002, %v825
    %v1019 = vsel %vm874, %v1003, %v826
    %v1020 = vand.u32 %v133, 7
    %vm1021 = vcmp.le.s32.totalorder %v1020, %v418
    %vm1022 = vcmp.le.s32.totalorder %v1020, %v419
    %vm1023 = vcmp.le.s32.totalorder %v1020, %v420
    %vm1024 = vcmp.le.s32.totalorder %v1020, %v421
    %vm1025 = vcmp.le.s32.totalorder %v1020, %v422
    %vm1026 = vcmp.le.s32.totalorder %v1020, %v423
    %vm1027 = vcmp.le.s32.totalorder %v1020, %v424
    %vm1028 = vcmp.le.s32.totalorder %v1020, %v425
    %vm1029 = vcmp.eq.s32.totalorder %v1020, %v434
    %vm1030 = vcmp.eq.s32.totalorder %v1020, %v435
    %vm1031 = vcmp.eq.s32.totalorder %v1020, %v436
    %vm1032 = vcmp.eq.s32.totalorder %v1020, %v437
    %vm1033 = vcmp.eq.s32.totalorder %v1020, %v438
    %vm1034 = vcmp.eq.s32.totalorder %v1020, %v439
    %vm1035 = vcmp.eq.s32.totalorder %v1020, %v440
    %vm1036 = vcmp.eq.s32.totalorder %v1020, %v441
    %v1037 = vsel %vm1029, 0.0, %v1012
    %v1038 = vsel %vm1030, 0.0, %v1013
    %v1039 = vsel %vm1031, 0.0, %v1014
    %v1040 = vsel %vm1032, 0.0, %v1015
    %v1041 = vsel %vm1033, 0.0, %v1016
    %v1042 = vsel %vm1034, 0.0, %v1017
    %v1043 = vsel %vm1035, 0.0, %v1018
    %v1044 = vsel %vm1036, 0.0, %v1019
    %v1045 = vsel %vm1021, %v1004, %v1037
    %v1046 = vsel %vm1022, %v1005, %v1038
    %v1047 = vsel %vm1023, %v1006, %v1039
    %v1048 = vsel %vm1024, %v1007, %v1040
    %v1049 = vsel %vm1025, %v1008, %v1041
    %v1050 = vsel %vm1026, %v1009, %v1042
    %v1051 = vsel %vm1027, %v1010, %v1043
    %v1052 = vsel %vm1028, %v1011, %v1044
    %1053 = vrot.lane.b32.xlu0 %v102, 96
    %v1054 = vpop.permute.xlu0 %1053
    %1055 = vrot.lane.b32.xlu0 %v107, 96
    %v1056 = vpop.permute.xlu0 %1055
    %v1058 = vsel %vm191, %v149, 0
    %v1061 = vsel %vm191, %v150, 0
    %v1064 = vsel %vm191, %v151, 0
    %v1067 = vsel %vm191, %v152, 0
    %v1070 = vsel %vm191, %v153, 0
    %v1073 = vsel %vm191, %v154, 0
    %v1076 = vsel %vm191, %v155, 0
    %v1079 = vsel %vm191, %v156, 0
    %v1081 = vsel %vm191, %v1054, 0
    %v1083 = vsel %vm191, %v1056, 0
    %1085 = vmatprep.subr.mxu0 0.0
    %1086 = vmatpush1.xpose.msra.mxu0 %v1081
    %1087 = vmatprep.subr.mxu0 0.0
    %1088 = vmatpush1.xpose.msra.mxu0 %v1083
    %1089 = vmatprep.subr.mxu0 0.0
    %1090 = vmatpush1.xpose.msra.mxu0 0.0
    %1091 = vmatprep.subr.mxu0 0.0
    %1092 = vmatpush1.xpose.msra.mxu0 0.0
    %1093 = vmatprep.subr.mxu0 0.0
    %1094 = vmatpush1.xpose.msra.mxu0 0.0
    %1095 = vmatprep.subr.mxu0 0.0
    %1096 = vmatpush1.xpose.msra.mxu0 0.0
    %1097 = vmatprep.subr.mxu0 0.0
    %1098 = vmatpush1.xpose.msra.mxu0 0.0
    %1099 = vmatprep.subr.mxu0 0.0
    %1100 = vmatpush1.xpose.msra.mxu0 0.0
    %1101 = vmatprep.subr.mxu0 0.0
    %1102 = vmatpush1.xpose.msra.mxu0 0.0
    %1103 = vmatprep.subr.mxu0 0.0
    %1104 = vmatpush1.xpose.msra.mxu0 0.0
    %1105 = vmatprep.subr.mxu0 0.0
    %1106 = vmatpush1.xpose.msra.mxu0 0.0
    %1107 = vmatprep.subr.mxu0 0.0
    %1108 = vmatpush1.xpose.msra.mxu0 0.0
    %1109 = vmatprep.subr.mxu0 0.0
    %1110 = vmatpush1.xpose.msra.mxu0 0.0
    %1111 = vmatprep.subr.mxu0 0.0
    %1112 = vmatpush1.xpose.msra.mxu0 0.0
    %1113 = vmatprep.subr.mxu0 0.0
    %1114 = vmatpush1.xpose.msra.mxu0 0.0
    %1115 = vmatprep.subr.mxu0 0.0
    %1116 = vmatpush1.xpose.msra.mxu0 0.0
    %1117 = vmatprep.subr.mxu0 0.0
    %1118 = vmatpush1.xpose.msra.mxu0 0.0
    %1119 = vmatprep.subr.mxu0 0.0
    %1120 = vmatpush1.xpose.msra.mxu0 0.0
    %1121 = vmatprep.subr.mxu0 0.0
    %1122 = vmatpush1.xpose.msra.mxu0 0.0
    %1123 = vmatprep.subr.mxu0 0.0
    %1124 = vmatpush1.xpose.msra.mxu0 0.0
    %1125 = vmatprep.subr.mxu0 0.0
    %1126 = vmatpush1.xpose.msra.mxu0 0.0
    %1127 = vmatprep.subr.mxu0 0.0
    %1128 = vmatpush1.xpose.msra.mxu0 0.0
    %1129 = vmatprep.subr.mxu0 0.0
    %1130 = vmatpush1.xpose.msra.mxu0 0.0
    %1131 = vmatprep.subr.mxu0 0.0
    %1132 = vmatpush1.xpose.msra.mxu0 0.0
    %1133 = vmatprep.subr.mxu0 0.0
    %1134 = vmatpush1.xpose.msra.mxu0 0.0
    %1135 = vmatprep.subr.mxu0 0.0
    %1136 = vmatpush1.xpose.msra.mxu0 0.0
    %1137 = vmatprep.subr.mxu0 0.0
    %1138 = vmatpush1.xpose.msra.mxu0 0.0
    %1139 = vmatprep.subr.mxu0 0.0
    %1140 = vmatpush1.xpose.msra.mxu0 0.0
    %1141 = vmatprep.subr.mxu0 0.0
    %1142 = vmatpush1.xpose.msra.mxu0 0.0
    %1143 = vmatprep.subr.mxu0 0.0
    %1144 = vmatpush1.xpose.msra.mxu0 0.0
    %1145 = vmatprep.subr.mxu0 0.0
    %1146 = vmatpush1.xpose.msra.mxu0 0.0
    %1147 = vmatprep.subr.mxu0 0.0
    %1148 = vmatpush1.xpose.msra.mxu0 0.0
    %1149 = vmatprep.mubr.f32.mxu0 0.0
    %1150 = vmatmul.mubr.f32.gmra.mrb[0].mxu0 %v1058
    %v1151 = vpop.f32.mrb[0].mxu0
    %v1152 = vadd.f32 %v1045, %v1151
    %v1153 = vpop.f32.mrb[0].mxu0
    %1154 = vmatprep.mubr.f32.mxu0 0.0
    %1155 = vmatmul.mubr.f32.gmra.mrb[0].mxu0 %v1061
    %v1156 = vpop.f32.mrb[0].mxu0
    %v1157 = vadd.f32 %v1046, %v1156
    %v1158 = vpop.f32.mrb[0].mxu0
    %1159 = vmatprep.mubr.f32.mxu0 0.0
    %1160 = vmatmul.mubr.f32.gmra.mrb[0].mxu0 %v1064
    %v1161 = vpop.f32.mrb[0].mxu0
    %v1162 = vadd.f32 %v1047, %v1161
    %v1163 = vpop.f32.mrb[0].mxu0
    %1164 = vmatprep.mubr.f32.mxu0 0.0
    %1165 = vmatmul.mubr.f32.gmra.mrb[0].mxu0 %v1067
    %v1166 = vpop.f32.mrb[0].mxu0
    %v1167 = vadd.f32 %v1048, %v1166
    %v1168 = vpop.f32.mrb[0].mxu0
    %1169 = vmatprep.mubr.f32.mxu0 0.0
    %1170 = vmatmul.mubr.f32.gmra.mrb[0].mxu0 %v1070
    %v1171 = vpop.f32.mrb[0].mxu0
    %v1172 = vadd.f32 %v1049, %v1171
    %v1173 = vpop.f32.mrb[0].mxu0
    %1174 = vmatprep.mubr.f32.mxu0 0.0
    %1175 = vmatmul.mubr.f32.gmra.mrb[0].mxu0 %v1073
    %v1176 = vpop.f32.mrb[0].mxu0
    %v1177 = vadd.f32 %v1050, %v1176
    %v1178 = vpop.f32.mrb[0].mxu0
    %1179 = vmatprep.mubr.f32.mxu0 0.0
    %1180 = vmatmul.mubr.f32.gmra.mrb[0].mxu0 %v1076
    %v1181 = vpop.f32.mrb[0].mxu0
    %v1182 = vadd.f32 %v1051, %v1181
    %v1183 = vpop.f32.mrb[0].mxu0
    %1184 = vmatprep.mubr.f32.mxu0 0.0
    %1185 = vmatmul.mubr.f32.gmra.mrb[0].mxu0 %v1079
    %v1186 = vpop.f32.mrb[0].mxu0
    %v1187 = vadd.f32 %v1052, %v1186
    %v1188 = vpop.f32.mrb[0].mxu0
    %1189 = vdwg.mxu0
    %v1190 = vld [vmem:[%s2] sm:$0xff]
    %v1191 = vld [vmem:[%s2 + $0x8] sm:$0xff]
    %v1192 = vld [vmem:[%s2 + $0x10] sm:$0xff]
    %v1193 = vld [vmem:[%s2 + $0x18] sm:$0xff]
    %v1194 = vld [vmem:[%s2 + $0x20] sm:$0xff]
    %v1195 = vld [vmem:[%s2 + $0x28] sm:$0xff]
    %v1196 = vld [vmem:[%s2 + $0x30] sm:$0xff]
    %v1197 = vld [vmem:[%s2 + $0x38] sm:$0xff]
    %v1198 = vadd.f32 %v1152, %v1190
    %v1199 = vadd.f32 %v1157, %v1191
    %v1200 = vadd.f32 %v1162, %v1192
    %v1201 = vadd.f32 %v1167, %v1193
    %v1202 = vadd.f32 %v1172, %v1194
    %v1203 = vadd.f32 %v1177, %v1195
    %v1204 = vadd.f32 %v1182, %v1196
    %v1205 = vadd.f32 %v1187, %v1197
    %vm1206 = vcmask 130048
    %v1207 = vsel %vm1206, %v1198, -inf
    %1208 = vmax.xlane.f32.xlu0 %v1207
    %v1209 = vpop.xlane.xlu0 %1208
    %v1210 = vsel %vm1206, %v1199, -inf
    %1211 = vmax.xlane.f32.xlu0 %v1210
    %v1212 = vpop.xlane.xlu0 %1211
    %v1213 = vsel %vm1206, %v1200, -inf
    %1214 = vmax.xlane.f32.xlu0 %v1213
    %v1215 = vpop.xlane.xlu0 %1214
    %v1216 = vsel %vm1206, %v1201, -inf
    %1217 = vmax.xlane.f32.xlu0 %v1216
    %v1218 = vpop.xlane.xlu0 %1217
    %v1219 = vsel %vm1206, %v1202, -inf
    %1220 = vmax.xlane.f32.xlu0 %v1219
    %v1221 = vpop.xlane.xlu0 %1220
    %v1222 = vsel %vm1206, %v1203, -inf
    %1223 = vmax.xlane.f32.xlu0 %v1222
    %v1224 = vpop.xlane.xlu0 %1223
    %v1225 = vsel %vm1206, %v1204, -inf
    %1226 = vmax.xlane.f32.xlu0 %v1225
    %v1227 = vpop.xlane.xlu0 %1226
    %v1228 = vsel %vm1206, %v1205, -inf
    %1229 = vmax.xlane.f32.xlu0 %v1228
    %v1230 = vpop.xlane.xlu0 %1229
    %v1231 = vsub.f32 %v1198, %v1209
    %v1232 = vsub.f32 %v1199, %v1212
    %v1233 = vsub.f32 %v1200, %v1215
    %v1234 = vsub.f32 %v1201, %v1218
    %v1235 = vsub.f32 %v1202, %v1221
    %v1236 = vsub.f32 %v1203, %v1224
    %v1237 = vsub.f32 %v1204, %v1227
    %v1238 = vsub.f32 %v1205, %v1230
    %v1239 = vmul.f32 %v1231, 1.442695
    %v1240 = vpow.pop %v1239
    %v1241 = vmul.f32 %v1232, 1.442695
    %v1242 = vpow.pop %v1241
    %v1243 = vmul.f32 %v1233, 1.442695
    %v1244 = vpow.pop %v1243
    %v1245 = vmul.f32 %v1234, 1.442695
    %v1246 = vpow.pop %v1245
    %v1247 = vmul.f32 %v1235, 1.442695
    %v1248 = vpow.pop %v1247
    %v1249 = vmul.f32 %v1236, 1.442695
    %v1250 = vpow.pop %v1249
    %v1251 = vmul.f32 %v1237, 1.442695
    %v1252 = vpow.pop %v1251
    %v1253 = vmul.f32 %v1238, 1.442695
    %v1254 = vpow.pop %v1253
    %v1255 = vsel %vm1206, %v1240, 0.0
    %1256 = vadd.xlane.f32.xlu0 %v1255
    %v1257 = vpop.xlane.xlu0 %1256
    %v1258 = vsel %vm1206, %v1242, 0.0
    %1259 = vadd.xlane.f32.xlu0 %v1258
    %v1260 = vpop.xlane.xlu0 %1259
    %v1261 = vsel %vm1206, %v1244, 0.0
    %1262 = vadd.xlane.f32.xlu0 %v1261
    %v1263 = vpop.xlane.xlu0 %1262
    %v1264 = vsel %vm1206, %v1246, 0.0
    %1265 = vadd.xlane.f32.xlu0 %v1264
    %v1266 = vpop.xlane.xlu0 %1265
    %v1267 = vsel %vm1206, %v1248, 0.0
    %1268 = vadd.xlane.f32.xlu0 %v1267
    %v1269 = vpop.xlane.xlu0 %1268
    %v1270 = vsel %vm1206, %v1250, 0.0
    %1271 = vadd.xlane.f32.xlu0 %v1270
    %v1272 = vpop.xlane.xlu0 %1271
    %v1273 = vsel %vm1206, %v1252, 0.0
    %1274 = vadd.xlane.f32.xlu0 %v1273
    %v1275 = vpop.xlane.xlu0 %1274
    %v1276 = vsel %vm1206, %v1254, 0.0
    %1277 = vadd.xlane.f32.xlu0 %v1276
    %v1278 = vpop.xlane.xlu0 %1277
    %v1279 = vrcp.pop %v1257
    %v1280 = vrcp.pop %v1260
    %v1281 = vrcp.pop %v1263
    %v1282 = vrcp.pop %v1266
    %v1283 = vrcp.pop %v1269
    %v1284 = vrcp.pop %v1272
    %v1285 = vrcp.pop %v1275
    %v1286 = vrcp.pop %v1278
    %v1287 = vmul.f32 %v1240, %v1279
    %v1288 = vmul.f32 %v1242, %v1280
    %v1289 = vmul.f32 %v1244, %v1281
    %v1290 = vmul.f32 %v1246, %v1282
    %v1291 = vmul.f32 %v1248, %v1283
    %v1292 = vmul.f32 %v1250, %v1284
    %v1293 = vmul.f32 %v1252, %v1285
    %v1294 = vmul.f32 %v1254, %v1286
    %1295 = vst.msk [vmem:[%s4] sm:$0xff] %vm1206, %v1287
    %1296 = vst.msk [vmem:[%s4 + $0x8] sm:$0xff] %vm1206, %v1288
    %1297 = vst.msk [vmem:[%s4 + $0x10] sm:$0xff] %vm1206, %v1289
    %1298 = vst.msk [vmem:[%s4 + $0x18] sm:$0xff] %vm1206, %v1290
    %1299 = vst.msk [vmem:[%s4 + $0x20] sm:$0xff] %vm1206, %v1291
    %1300 = vst.msk [vmem:[%s4 + $0x28] sm:$0xff] %vm1206, %v1292
    %1301 = vst.msk [vmem:[%s4 + $0x30] sm:$0xff] %vm1206, %v1293
    %1302 = vst.msk [vmem:[%s4 + $0x38] sm:$0xff] %vm1206, %v1294
    %1305 = vrot.lane.b32.xlu0 %v1289, 16
    %v1306 = vpop.permute.xlu0 %1305
    %1307 = vrot.lane.b32.xlu0 %v1290, 16
    %v1308 = vpop.permute.xlu0 %1307
    %1313 = vrot.lane.b32.xlu0 %v1291, 32
    %v1314 = vpop.permute.xlu0 %1313
    %1315 = vrot.lane.b32.xlu0 %v1292, 32
    %v1316 = vpop.permute.xlu0 %1315
    %1321 = vrot.lane.b32.xlu0 %v1293, 48
    %v1322 = vpop.permute.xlu0 %1321
    %1323 = vrot.lane.b32.xlu0 %v1294, 48
    %v1324 = vpop.permute.xlu0 %1323
    %v1327 = vsel %vm1206, %v1287, %v1306
    %v1328 = vsel %vm1206, %v1288, %v1308
    %v1329 = vsel %vm191, %v1327, %v1314
    %v1330 = vsel %vm191, %v1328, %v1316
    %vm1331 = vcmask 392192
    %v1332 = vsel %vm1331, %v1329, %v1322
    %v1333 = vsel %vm1331, %v1330, %v1324
    %vm1334 = vcmask 523264
    %v1336 = vsel %vm1334, %v1332, 0
    %v1339 = vsel %vm1334, %v1333, 0
    %1341 = vmatprep.subr.mxu0 0.0
    %1342 = vmatpush1.msra.mxu0 %v179
    %1343 = vmatprep.subr.mxu0 0.0
    %1344 = vmatpush1.msra.mxu0 %v180
    %1345 = vmatprep.subr.mxu0 0.0
    %1346 = vmatpush1.msra.mxu0 %v181
    %1347 = vmatprep.subr.mxu0 0.0
    %1348 = vmatpush1.msra.mxu0 %v182
    %1349 = vmatprep.subr.mxu0 0.0
    %1350 = vmatpush1.msra.mxu0 %v183
    %1351 = vmatprep.subr.mxu0 0.0
    %1352 = vmatpush1.msra.mxu0 %v184
    %1353 = vmatprep.subr.mxu0 0.0
    %1354 = vmatpush1.msra.mxu0 %v185
    %1355 = vmatprep.subr.mxu0 0.0
    %1356 = vmatpush1.msra.mxu0 %v186
    %1357 = vmatprep.subr.mxu0 0.0
    %1358 = vmatpush1.msra.mxu0 0.0
    %1359 = vmatprep.subr.mxu0 0.0
    %1360 = vmatpush1.msra.mxu0 0.0
    %1361 = vmatprep.subr.mxu0 0.0
    %1362 = vmatpush1.msra.mxu0 0.0
    %1363 = vmatprep.subr.mxu0 0.0
    %1364 = vmatpush1.msra.mxu0 0.0
    %1365 = vmatprep.subr.mxu0 0.0
    %1366 = vmatpush1.msra.mxu0 0.0
    %1367 = vmatprep.subr.mxu0 0.0
    %1368 = vmatpush1.msra.mxu0 0.0
    %1369 = vmatprep.subr.mxu0 0.0
    %1370 = vmatpush1.msra.mxu0 0.0
    %1371 = vmatprep.subr.mxu0 0.0
    %1372 = vmatpush1.msra.mxu0 0.0
    %1373 = vmatprep.subr.mxu0 0.0
    %1374 = vmatpush1.msra.mxu0 0.0
    %1375 = vmatprep.subr.mxu0 0.0
    %1376 = vmatpush1.msra.mxu0 0.0
    %1377 = vmatprep.subr.mxu0 0.0
    %1378 = vmatpush1.msra.mxu0 0.0
    %1379 = vmatprep.subr.mxu0 0.0
    %1380 = vmatpush1.msra.mxu0 0.0
    %1381 = vmatprep.subr.mxu0 0.0
    %1382 = vmatpush1.msra.mxu0 0.0
    %1383 = vmatprep.subr.mxu0 0.0
    %1384 = vmatpush1.msra.mxu0 0.0
    %1385 = vmatprep.subr.mxu0 0.0
    %1386 = vmatpush1.msra.mxu0 0.0
    %1387 = vmatprep.subr.mxu0 0.0
    %1388 = vmatpush1.msra.mxu0 0.0
    %1389 = vmatprep.subr.mxu0 0.0
    %1390 = vmatpush1.msra.mxu0 0.0
    %1391 = vmatprep.subr.mxu0 0.0
    %1392 = vmatpush1.msra.mxu0 0.0
    %1393 = vmatprep.subr.mxu0 0.0
    %1394 = vmatpush1.msra.mxu0 0.0
    %1395 = vmatprep.subr.mxu0 0.0
    %1396 = vmatpush1.msra.mxu0 0.0
    %1397 = vmatprep.subr.mxu0 0.0
    %1398 = vmatpush1.msra.mxu0 0.0
    %1399 = vmatprep.subr.mxu0 0.0
    %1400 = vmatpush1.msra.mxu0 0.0
    %1401 = vmatprep.subr.mxu0 0.0
    %1402 = vmatpush1.msra.mxu0 0.0
    %1403 = vmatprep.subr.mxu0 0.0
    %1404 = vmatpush1.msra.mxu0 0.0
    %1405 = vmatprep.mubr.f32.mxu0 0.0
    %1406 = vmatmul.mubr.f32.gmra.mrb[0].mxu0 %v1336
    %v1407 = vpop.f32.mrb[0].mxu0
    %v1408 = vadd.f32 0.0, %v1407
    %v1409 = vpop.f32.mrb[0].mxu0
    %1410 = vmatprep.mubr.f32.mxu0 0.0
    %1411 = vmatmul.mubr.f32.gmra.mrb[0].mxu0 %v1339
    %v1412 = vpop.f32.mrb[0].mxu0
    %v1413 = vadd.f32 0.0, %v1412
    %v1414 = vpop.f32.mrb[0].mxu0
    %1415 = vdwg.mxu0
    %v1416 = vlaneseq
    %v1417 = vshrl.u32 %v1416, 7
    %v1418 = vsub.s32 2, %v1417
    %v1419 = vrot.slane %v114, %v1418
    %v1421 = vsel %vm191, %v1408, 0
    %v1424 = vsel %vm191, %v1413, 0
    %1426 = vmatprep.subr.mxu0 0.0
    %1427 = vmatpush1.msra.mxu0 %v110
    %1428 = vmatprep.subr.mxu0 0.0
    %1429 = vmatpush1.msra.mxu0 %v111
    %1430 = vmatprep.subr.mxu0 0.0
    %1431 = vmatpush1.msra.mxu0 %v112
    %1432 = vmatprep.subr.mxu0 0.0
    %1433 = vmatpush1.msra.mxu0 %v113
    %1434 = vmatprep.subr.mxu0 0.0
    %1435 = vmatpush1.msra.mxu0 0.0
    %1436 = vmatprep.subr.mxu0 0.0
    %1437 = vmatpush1.msra.mxu0 0.0
    %1438 = vmatprep.subr.mxu0 0.0
    %1439 = vmatpush1.msra.mxu0 0.0
    %1440 = vmatprep.subr.mxu0 0.0
    %1441 = vmatpush1.msra.mxu0 0.0
    %1442 = vmatprep.subr.mxu0 0.0
    %1443 = vmatpush1.msra.mxu0 0.0
    %1444 = vmatprep.subr.mxu0 0.0
    %1445 = vmatpush1.msra.mxu0 0.0
    %1446 = vmatprep.subr.mxu0 0.0
    %1447 = vmatpush1.msra.mxu0 0.0
    %1448 = vmatprep.subr.mxu0 0.0
    %1449 = vmatpush1.msra.mxu0 0.0
    %1450 = vmatprep.subr.mxu0 0.0
    %1451 = vmatpush1.msra.mxu0 0.0
    %1452 = vmatprep.subr.mxu0 0.0
    %1453 = vmatpush1.msra.mxu0 0.0
    %1454 = vmatprep.subr.mxu0 0.0
    %1455 = vmatpush1.msra.mxu0 0.0
    %1456 = vmatprep.subr.mxu0 0.0
    %1457 = vmatpush1.msra.mxu0 0.0
    %1458 = vmatprep.subr.mxu0 0.0
    %1459 = vmatpush1.msra.mxu0 0.0
    %1460 = vmatprep.subr.mxu0 0.0
    %1461 = vmatpush1.msra.mxu0 0.0
    %1462 = vmatprep.subr.mxu0 0.0
    %1463 = vmatpush1.msra.mxu0 0.0
    %1464 = vmatprep.subr.mxu0 0.0
    %1465 = vmatpush1.msra.mxu0 0.0
    %1466 = vmatprep.subr.mxu0 0.0
    %1467 = vmatpush1.msra.mxu0 0.0
    %1468 = vmatprep.subr.mxu0 0.0
    %1469 = vmatpush1.msra.mxu0 0.0
    %1470 = vmatprep.subr.mxu0 0.0
    %1471 = vmatpush1.msra.mxu0 0.0
    %1472 = vmatprep.subr.mxu0 0.0
    %1473 = vmatpush1.msra.mxu0 0.0
    %1474 = vmatprep.subr.mxu0 0.0
    %1475 = vmatpush1.msra.mxu0 0.0
    %1476 = vmatprep.subr.mxu0 0.0
    %1477 = vmatpush1.msra.mxu0 0.0
    %1478 = vmatprep.subr.mxu0 0.0
    %1479 = vmatpush1.msra.mxu0 0.0
    %1480 = vmatprep.subr.mxu0 0.0
    %1481 = vmatpush1.msra.mxu0 0.0
    %1482 = vmatprep.subr.mxu0 0.0
    %1483 = vmatpush1.msra.mxu0 0.0
    %1484 = vmatprep.subr.mxu0 0.0
    %1485 = vmatpush1.msra.mxu0 0.0
    %1486 = vmatprep.subr.mxu0 0.0
    %1487 = vmatpush1.msra.mxu0 0.0
    %1488 = vmatprep.subr.mxu0 0.0
    %1489 = vmatpush1.msra.mxu0 0.0
    %1490 = vmatprep.mubr.f32.mxu0 0.0
    %1491 = vmatmul.mubr.f32.gmra.mrb[0].mxu0 %v1421
    %v1492 = vpop.f32.mrb[0].mxu0
    %v1493 = vadd.f32 %v1419, %v1492
    %v1494 = vpop.f32.mrb[0].mxu0
    %1495 = vmatprep.mubr.f32.mxu0 0.0
    %1496 = vmatmul.mubr.f32.gmra.mrb[0].mxu0 %v1424
    %v1497 = vpop.f32.mrb[0].mxu0
    %v1498 = vadd.f32 %v1419, %v1497
    %v1499 = vpop.f32.mrb[0].mxu0
    %1500 = vdwg.mxu0
    %1501 = vst.msk [vmem:[#allocation2] sm:$0xff] %vm191, %v1493
    %1502 = vst.msk [vmem:[#allocation2 + $0x8] sm:$0xff] %vm191, %v1498
    // Predicated region
    $region14: #{conformer_mhsa_pallas.1} parent=1 // pred_check
      _
    $region15: #{conformer_mhsa_pallas.1} parent=1 // pred_check_branch
      %1504 = sbr.rel (0) target = $region17
    $region16: #{conformer_mhsa_pallas.1} parent=1 // pred_region
      %s1506 = ssub.s32 256, 256
      %1507 = vsyncadd [#allocation3], %s1506
      %s1508 = sshll.u32 [#allocation2], 4
      %s1509 = int_to_ptr.vmem [resolvable:$true] %s1508
      %1514 = dma.vmem_to_hbm [thread:$0]  %s1509, 256, %s3, [#allocation3], 128, 128, 8
    $region17: #{conformer_mhsa_pallas.1} parent=1 // pred_fallthru
      _
    // Predicated region
    $region18: #{conformer_mhsa_pallas.1} parent=1 // pred_check
      _
    $region19: #{conformer_mhsa_pallas.1} parent=1 // pred_check_branch
      %1516 = sbr.rel (0) target = $region21
    $region20: #{conformer_mhsa_pallas.1} parent=1 // pred_region
      _
    $region21: #{conformer_mhsa_pallas.1} parent=1 // pred_fallthru
      _
    // Predicated region
    $region22: #{conformer_mhsa_pallas.1} parent=1 // pred_check
      _
    $region23: #{conformer_mhsa_pallas.1} parent=1 // pred_check_branch
      %1518 = sbr.rel (0) target = $region25
    $region24: #{conformer_mhsa_pallas.1} parent=1 // pred_region
      %1519 = dma.done [#allocation3], 256
    $region25: #{conformer_mhsa_pallas.1} parent=1 // pred_fallthru
      _
    // Predicated region
    $region26: #{conformer_mhsa_pallas.1} parent=1 // pred_check
      _
    $region27: #{conformer_mhsa_pallas.1} parent=1 // pred_check_branch
      %1521 = sbr.rel (0) target = $region29
    $region28: #{conformer_mhsa_pallas.1} parent=1 // pred_region
      _
    $region29: #{conformer_mhsa_pallas.1} parent=1 // pred_fallthru
      _
    %1522 = vsyncpa [#allocation3], 1

</llo_original>
